<compile_context>
chip_gen: v7x
topology: tpu7x:2x2x1
jax: 0.10.0
libtpu: 0.0.40
codegen_flags: <defaults>
</compile_context>

<pallas_src>
import jax
import jax.numpy as jnp
from jax.experimental import pallas as pl
from jax.experimental.pallas import tpu as pltpu

NUM_INPUT = 2
NUM_OUTPUT = 2
HID = (10, 15, 10)
LANE = 128          # padded output-feature (lane) width of every layer
GROUP = 8           # rows per independent softmax(dim=0) batch (one sublane tile)

# K (fan_in) padded to multiples of 8, packed row offsets inside the weight slab.
_K_PAD = (8, 16, 16, 16)        # 2->8, 10->16, 15->16, 10->16
_K_OFF = (0, 8, 24, 40)
_K_TOTAL = 56                   # sum(_K_PAD), multiple of 8
DEFAULT_TILE_ROWS = 256         # >=256 fills v6e/v7x MXU M; adapt down for tiny batches


def anet_kernel(x_ref, w_ref, b_ref, o_ref):
    # ---- Linear + ReLU stack (MXU matmuls, f32 accumulation). ----
    # Layer 1: (TILE, 8) @ (8, 128)
    h = jnp.dot(x_ref[...], w_ref[0:8, :],
                preferred_element_type=jnp.float32) + b_ref[0:1, :]
    h = jnp.maximum(h, 0.0)
    # Layer 2: contract only the first 16 lanes (true fan_in 10, zero-padded).
    h = jnp.dot(h[:, :16], w_ref[8:24, :],
                preferred_element_type=jnp.float32) + b_ref[1:2, :]
    h = jnp.maximum(h, 0.0)
    # Layer 3: true fan_in 15, padded to 16.
    h = jnp.dot(h[:, :16], w_ref[24:40, :],
                preferred_element_type=jnp.float32) + b_ref[2:3, :]
    h = jnp.maximum(h, 0.0)
    # Layer 4 (no ReLU): true fan_in 10, padded to 16.
    z = jnp.dot(h[:, :16], w_ref[40:56, :],
                preferred_element_type=jnp.float32) + b_ref[3:4, :]

    # ---- Softmax over dim=0 within each independent 8-row group. ----
    tile = z.shape[0]
    zg = z.reshape(tile // GROUP, GROUP, LANE)          # one vreg per group
    m = jnp.max(zg, axis=1, keepdims=True)
    e = jnp.exp(zg - m)
    s = jnp.sum(e, axis=1, keepdims=True)
    p = e * pl.reciprocal(s, approx=False)
    # logits = logits / sum(logits, dim=0, keepdim=True) — idempotent after
    # softmax but kept for exact module semantics (reciprocal + multiply).
    p = p * pl.reciprocal(jnp.sum(p, axis=1, keepdims=True), approx=False)

    # TODO(synk): the `moves` masking path (python set membership over logit
    # indices) is data-dependent host logic; only the moves=None path is
    # implemented in-kernel.
    o_ref[...] = p.reshape(tile, LANE)


def init_params(key):
    """Unpadded params mimicking torch.nn.Linear init (uniform +-1/sqrt(fan_in)).

    Returns a list of (w, b) with w shaped (fan_in, fan_out) — i.e. transposed
    vs. torch — and b shaped (fan_out,).
    """
    dims = (NUM_INPUT,) + HID + (NUM_OUTPUT,)
    keys = jax.random.split(key, 2 * (len(dims) - 1))
    params = []
    for i in range(len(dims) - 1):
        fan_in, fan_out = dims[i], dims[i + 1]
        bound = 1.0 / jnp.sqrt(fan_in)
        w = jax.random.uniform(keys[2 * i], (fan_in, fan_out),
                               minval=-bound, maxval=bound, dtype=jnp.float32)
        b = jax.random.uniform(keys[2 * i + 1], (fan_out,),
                               minval=-bound, maxval=bound, dtype=jnp.float32)
        params.append((w, b))
    return params


def pack_params(params):
    """Pack all weights into one (56, 128) slab and biases into one (8, 128)."""
    wpack = jnp.zeros((_K_TOTAL, LANE), dtype=jnp.float32)
    bpack = jnp.zeros((GROUP, LANE), dtype=jnp.float32)
    for i, (w, b) in enumerate(params):
        fi, fo = w.shape
        wpack = wpack.at[_K_OFF[i]:_K_OFF[i] + fi, :fo].set(w)
        bpack = bpack.at[i, :fo].set(b)
    return wpack, bpack


def anet_forward(x, wpack, bpack, *, tile_rows=DEFAULT_TILE_ROWS):
    """x: (G*8, NUM_INPUT) float32; each consecutive 8 rows is an independent
    batch for Softmax(dim=0).  Returns (G*8, NUM_OUTPUT)."""
    rows, nin = x.shape
    assert nin == NUM_INPUT
    assert rows % GROUP == 0, "batch rows must be a multiple of 8 (one group)"

    tile = min(tile_rows, rows)                   # multiple of 8 by construction
    padded_rows = pl.cdiv(rows, tile) * tile      # pad in whole tiles (whole groups)

    xp = jnp.zeros((padded_rows, _K_PAD[0]), dtype=jnp.float32)
    xp = xp.at[:rows, :nin].set(x.astype(jnp.float32))

    grid = (padded_rows // tile,)
    out = pl.pallas_call(
        anet_kernel,
        out_shape=jax.ShapeDtypeStruct((padded_rows, LANE), jnp.float32),
        grid=grid,
        in_specs=[
            pl.BlockSpec((tile, _K_PAD[0]), lambda g: (g, 0)),   # activations tile
            pl.BlockSpec((_K_TOTAL, LANE), lambda g: (0, 0)),    # resident weights
            pl.BlockSpec((GROUP, LANE), lambda g: (0, 0)),       # resident biases
        ],
        out_specs=pl.BlockSpec((tile, LANE), lambda g: (g, 0)),  # lane-dense out
        compiler_params=pltpu.CompilerParams(
            dimension_semantics=("parallel",)),
    )(xp, wpack, bpack)
    return out[:rows, :NUM_OUTPUT]


def anet_reference(x, params):
    """Pure-JAX reference: same MLP, softmax(dim=0) per 8-row group, renorm."""
    rows = x.shape[0]
    h = x.astype(jnp.float32)
    for i, (w, b) in enumerate(params):
        h = h @ w + b
        if i < len(params) - 1:
            h = jnp.maximum(h, 0.0)
    z = h.reshape(rows // GROUP, GROUP, NUM_OUTPUT)
    p = jax.nn.softmax(z, axis=1)
    p = p / jnp.sum(p, axis=1, keepdims=True)
    return p.reshape(rows, NUM_OUTPUT)


if __name__ == "__main__":
    key = jax.random.PRNGKey(0)
    pkey, xkey = jax.random.split(key)

    params = init_params(pkey)
    wpack, bpack = pack_params(params)

    G = 64  # 64 independent 8-row batches -> 512 rows -> grid of two 256-row tiles
    x = jax.random.normal(xkey, (G * GROUP, NUM_INPUT), dtype=jnp.float32)

    out = jax.block_until_ready(anet_forward(x, wpack, bpack))
    ref = anet_reference(x, params)

    assert out.shape == (G * GROUP, NUM_OUTPUT)
    assert jnp.allclose(out, ref, atol=1e-5, rtol=1e-4), "mismatch vs reference"
    print("KERNEL_OK")
</pallas_src>

<mosaic_0001>
module attributes {stable_mosaic.version = 11 : i64} {
  func.func @anet_kernel(%arg0: i32, %arg1: memref<256x8xf32, #tpu.memory_space<vmem>>, %arg2: memref<56x128xf32, #tpu.memory_space<vmem>>, %arg3: memref<8x128xf32, #tpu.memory_space<vmem>>, %arg4: memref<256x128xf32, #tpu.memory_space<vmem>>) attributes {dimension_semantics = [#tpu.dimension_semantics<parallel>], iteration_bounds = array<i64: 2>, scalar_prefetch = 0 : i64, scratch_operands = 0 : i64, tpu.core_type = #tpu.core_type<tc>, window_params = [{transform_indices = @transform_0, window_bounds = array<i64: 256, 8>}, {pipeline_mode = #tpu.pipeline_mode<synchronous>, transform_indices = @transform_1, window_bounds = array<i64: 56, 128>}, {pipeline_mode = #tpu.pipeline_mode<synchronous>, transform_indices = @transform_2, window_bounds = array<i64: 8, 128>}, {transform_indices = @transform_3, window_bounds = array<i64: 256, 128>}]} {
    %c0 = arith.constant 0 : index
    %c0_0 = arith.constant 0 : index
    %0 = vector.load %arg1[%c0, %c0_0] : memref<256x8xf32, #tpu.memory_space<vmem>>, vector<256x8xf32>
    %c0_1 = arith.constant 0 : index
    %c0_2 = arith.constant 0 : index
    %1 = vector.load %arg2[%c0_1, %c0_2] : memref<56x128xf32, #tpu.memory_space<vmem>>, vector<8x128xf32>
    %cst = arith.constant dense<0.000000e+00> : vector<256x128xf32>
    %2 = tpu.matmul %0, %1, %cst {dimension_numbers = #tpu.dot_dimension_numbers<[1], [0], [0], [1], [0, 0, 1, 1], [], []>} : vector<256x8xf32>, vector<8x128xf32>, vector<256x128xf32> -> vector<256x128xf32>
    %c0_3 = arith.constant 0 : index
    %c0_4 = arith.constant 0 : index
    %3 = vector.load %arg3[%c0_3, %c0_4] : memref<8x128xf32, #tpu.memory_space<vmem>>, vector<1x128xf32>
    %4 = vector.broadcast %3 : vector<1x128xf32> to vector<256x128xf32>
    %5 = arith.addf %2, %4 : vector<256x128xf32>
    %cst_5 = arith.constant 0.000000e+00 : f32
    %6 = vector.broadcast %cst_5 : f32 to vector<256x128xf32>
    %7 = arith.maximumf %5, %6 : vector<256x128xf32>
    %8 = vector.extract_strided_slice %7 {offsets = [0, 0], sizes = [256, 16], strides = [1, 1]} : vector<256x128xf32> to vector<256x16xf32>
    %c8 = arith.constant 8 : index
    %c0_6 = arith.constant 0 : index
    %9 = vector.load %arg2[%c8, %c0_6] : memref<56x128xf32, #tpu.memory_space<vmem>>, vector<16x128xf32>
    %cst_7 = arith.constant dense<0.000000e+00> : vector<256x128xf32>
    %10 = tpu.matmul %8, %9, %cst_7 {dimension_numbers = #tpu.dot_dimension_numbers<[1], [0], [0], [1], [0, 0, 1, 1], [], []>} : vector<256x16xf32>, vector<16x128xf32>, vector<256x128xf32> -> vector<256x128xf32>
    %c1 = arith.constant 1 : index
    %c0_8 = arith.constant 0 : index
    %11 = vector.load %arg3[%c1, %c0_8] : memref<8x128xf32, #tpu.memory_space<vmem>>, vector<1x128xf32>
    %12 = vector.broadcast %11 : vector<1x128xf32> to vector<256x128xf32>
    %13 = arith.addf %10, %12 : vector<256x128xf32>
    %cst_9 = arith.constant 0.000000e+00 : f32
    %14 = vector.broadcast %cst_9 : f32 to vector<256x128xf32>
    %15 = arith.maximumf %13, %14 : vector<256x128xf32>
    %16 = vector.extract_strided_slice %15 {offsets = [0, 0], sizes = [256, 16], strides = [1, 1]} : vector<256x128xf32> to vector<256x16xf32>
    %c24 = arith.constant 24 : index
    %c0_10 = arith.constant 0 : index
    %17 = vector.load %arg2[%c24, %c0_10] : memref<56x128xf32, #tpu.memory_space<vmem>>, vector<16x128xf32>
    %cst_11 = arith.constant dense<0.000000e+00> : vector<256x128xf32>
    %18 = tpu.matmul %16, %17, %cst_11 {dimension_numbers = #tpu.dot_dimension_numbers<[1], [0], [0], [1], [0, 0, 1, 1], [], []>} : vector<256x16xf32>, vector<16x128xf32>, vector<256x128xf32> -> vector<256x128xf32>
    %c2 = arith.constant 2 : index
    %c0_12 = arith.constant 0 : index
    %19 = vector.load %arg3[%c2, %c0_12] : memref<8x128xf32, #tpu.memory_space<vmem>>, vector<1x128xf32>
    %20 = vector.broadcast %19 : vector<1x128xf32> to vector<256x128xf32>
    %21 = arith.addf %18, %20 : vector<256x128xf32>
    %cst_13 = arith.constant 0.000000e+00 : f32
    %22 = vector.broadcast %cst_13 : f32 to vector<256x128xf32>
    %23 = arith.maximumf %21, %22 : vector<256x128xf32>
    %24 = vector.extract_strided_slice %23 {offsets = [0, 0], sizes = [256, 16], strides = [1, 1]} : vector<256x128xf32> to vector<256x16xf32>
    %c40 = arith.constant 40 : index
    %c0_14 = arith.constant 0 : index
    %25 = vector.load %arg2[%c40, %c0_14] : memref<56x128xf32, #tpu.memory_space<vmem>>, vector<16x128xf32>
    %cst_15 = arith.constant dense<0.000000e+00> : vector<256x128xf32>
    %26 = tpu.matmul %24, %25, %cst_15 {dimension_numbers = #tpu.dot_dimension_numbers<[1], [0], [0], [1], [0, 0, 1, 1], [], []>} : vector<256x16xf32>, vector<16x128xf32>, vector<256x128xf32> -> vector<256x128xf32>
    %c3 = arith.constant 3 : index
    %c0_16 = arith.constant 0 : index
    %27 = vector.load %arg3[%c3, %c0_16] : memref<8x128xf32, #tpu.memory_space<vmem>>, vector<1x128xf32>
    %28 = vector.broadcast %27 : vector<1x128xf32> to vector<256x128xf32>
    %29 = arith.addf %26, %28 : vector<256x128xf32>
    %30 = vector.shape_cast %29 : vector<256x128xf32> to vector<32x8x128xf32>
    %cst_17 = arith.constant dense<0xFF800000> : vector<32x128xf32>
    %31 = vector.multi_reduction <maximumf>, %30, %cst_17 [1] : vector<32x8x128xf32> to vector<32x128xf32>
    %32 = vector.shape_cast %31 : vector<32x128xf32> to vector<32x1x128xf32>
    %33 = vector.broadcast %32 : vector<32x1x128xf32> to vector<32x8x128xf32>
    %34 = arith.subf %30, %33 : vector<32x8x128xf32>
    %35 = math.exp %34 : vector<32x8x128xf32>
    %cst_18 = arith.constant dense<0.000000e+00> : vector<32x128xf32>
    %36 = vector.multi_reduction <add>, %35, %cst_18 [1] : vector<32x8x128xf32> to vector<32x128xf32>
    %37 = vector.shape_cast %36 : vector<32x128xf32> to vector<32x1x128xf32>
    %38 = tpu.reciprocal %37 : vector<32x1x128xf32> -> vector<32x1x128xf32>
    %39 = vector.broadcast %38 : vector<32x1x128xf32> to vector<32x8x128xf32>
    %40 = arith.mulf %35, %39 : vector<32x8x128xf32>
    %cst_19 = arith.constant dense<0.000000e+00> : vector<32x128xf32>
    %41 = vector.multi_reduction <add>, %40, %cst_19 [1] : vector<32x8x128xf32> to vector<32x128xf32>
    %42 = vector.shape_cast %41 : vector<32x128xf32> to vector<32x1x128xf32>
    %43 = tpu.reciprocal %42 : vector<32x1x128xf32> -> vector<32x1x128xf32>
    %44 = vector.broadcast %43 : vector<32x1x128xf32> to vector<32x8x128xf32>
    %45 = arith.mulf %40, %44 : vector<32x8x128xf32>
    %46 = vector.shape_cast %45 : vector<32x8x128xf32> to vector<256x128xf32>
    %c0_20 = arith.constant 0 : index
    %c0_21 = arith.constant 0 : index
    %47 = vector.load %arg4[%c0_20, %c0_21] : memref<256x128xf32, #tpu.memory_space<vmem>>, vector<256x128xf32>
    tpu.vector_store %arg4[%c0_20, %c0_21], %46 {strides = array<i32>} : memref<256x128xf32, #tpu.memory_space<vmem>>, vector<256x128xf32>,
    return
  }
  func.func @transform_0(%arg0: i32) -> (i32, i32) {
    %c0_i32 = arith.constant 0 : i32
    %c0_i32_0 = arith.constant 0 : i32
    return %arg0, %c0_i32 : i32, i32
  }
  func.func @transform_1(%arg0: i32) -> (i32, i32) {
    %c0_i32 = arith.constant 0 : i32
    %c0_i32_0 = arith.constant 0 : i32
    %c0_i32_1 = arith.constant 0 : i32
    return %c0_i32, %c0_i32_0 : i32, i32
  }
  func.func @transform_2(%arg0: i32) -> (i32, i32) {
    %c0_i32 = arith.constant 0 : i32
    %c0_i32_0 = arith.constant 0 : i32
    %c0_i32_1 = arith.constant 0 : i32
    return %c0_i32, %c0_i32_0 : i32, i32
  }
  func.func @transform_3(%arg0: i32) -> (i32, i32) {
    %c0_i32 = arith.constant 0 : i32
    %c0_i32_0 = arith.constant 0 : i32
    return %arg0, %c0_i32 : i32, i32
  }
}

</mosaic_0001>

<llo_original>
// kernel: tpu_custom_call.1
$region0: #{tpu_custom_call.1}
  #allocation0 [shape = 'u32[]', space=smem, size = 0x4, offset = 0x4, fixed_abs, tag = 'smem constant byte address 0x4 - core index']
  #allocation1 [shape = 'u32[144,128]{1,0:T(1,128)}', space=vmem, size = 0x12000, scoped, tag = 'internal scratch']
  %s0 = inlined_call_operand.vmem [shape: f32[512,8], index: 0, kind: input, shape index: {}]
  %s1 = inlined_call_operand.vmem [shape: f32[56,128], index: 1, kind: input, shape index: {}]
  %s2 = inlined_call_operand.vmem [shape: f32[8,128], index: 2, kind: input, shape index: {}]
  %s3 = inlined_call_operand.hbm [shape: f32[512,128], index: 3, kind: output, shape index: {}]
  %s4 = sld [smem:[#allocation0]]
  $region45: #{tpu_custom_call.1} parent=0
    _
  %s6 = ssub.s32 1, %s4
  %s7 = scalar_select 0, %s6, %s4
  $region1: #{tpu_custom_call.1} parent=0
    #allocation2 [shape = 'u8[262144]{0}', space=vmem, size = 0x40000, scoped, tag = 'output window, operand 0']
    #allocation3 [shape = 's32[2]{0}', space=sflag, size = 0x8, scoped, tag = 'scoped memory for tpu_custom_call.1']
    %8 = vsyncpa [#allocation3], 0
    %s9 = scalar_lea.sflag [#allocation3], 1
    %10 = vsyncpa %s9, 0
    loop: start=0, step=1, limit=4
    $region2: #{tpu_custom_call.1} parent=1 // loop_pre_header
      _
    $region3: #{tpu_custom_call.1} parent=1 // loop_header
      %s12 = sphi 0, %s16
      %p13 = scmp.ge.s32.totalorder %s12, 4
      %s22 = sphi 0, %s24
      %s25 = sphi 0, %s22
      %s26 = sphi 0, %s25
      %s42 = sphi 0, %s26
      %s46 = sphi 0, %s46
      %s48 = sphi 0, %s46
      %s49 = sphi 0, %s48
      %s63 = sphi 0, %s49
      %s67 = sphi 0, %s67
      %s69 = sphi 0, %s67
      %s70 = sphi 0, %s69
      %s84 = sphi 0, %s70
      %s90 = sphi 0, %s92
      %s93 = sphi 0, %s90
      %s94 = sphi 0, %s93
      %s110 = sphi 0, %s94
    $region4: #{tpu_custom_call.1} parent=1 // loop_header_branch
      %15 = sbr.rel (%p13) target = $region8
    $region5: #{tpu_custom_call.1} parent=1 // loop_body
      %s17 = ssub.s32 %s12, 1
      %s18 = ssub.s32 %s12, 2
      %s19 = sadd.s32 %s12, 1
      %s20 = ssub.s32 %s12, %s19
      %p21 = scmp.eq.s32.totalorder %s20, 0
      %s23 = sadd.s32 %s22, 1
      %s24 = scalar_select %p21, %s22, %s23
      %p27 = pneg %p21
      %p28 = scmp.eq.s32.totalorder %s12, 1
      %p29 = por %p27, %p28
      %p30 = scmp.ne.s32.totalorder %s22, %s25
      %p31 = scmp.eq.s32.totalorder %s12, 0
      %p32 = por %p30, %p31
      %p33 = scmp.ne.s32.totalorder %s22, %s25
      %p34 = scmp.eq.s32.totalorder %s17, 1
      %p35 = por %p33, %p34
      %p36 = scmp.ne.s32.totalorder %s25, %s26
      %p37 = scmp.eq.s32.totalorder %s17, 0
      %p38 = por %p36, %p37
      %p39 = scmp.ne.s32.totalorder %s25, %s26
      %p40 = scmp.eq.s32.totalorder %s18, 1
      %p41 = por %p39, %p40
      %p43 = scmp.ne.s32.totalorder %s26, %s42
      %p44 = scmp.eq.s32.totalorder %s18, 0
      %p45 = por %p43, %p44
      %s47 = sadd.s32 %s46, 1
      %p50 = scmp.eq.s32.totalorder %s12, 1
      %p51 = scmp.ne.s32.totalorder %s46, %s48
      %p52 = scmp.eq.s32.totalorder %s12, 0
      %p53 = por %p51, %p52
      %p54 = scmp.ne.s32.totalorder %s46, %s48
      %p55 = scmp.eq.s32.totalorder %s17, 1
      %p56 = por %p54, %p55
      %p57 = scmp.ne.s32.totalorder %s48, %s49
      %p58 = scmp.eq.s32.totalorder %s17, 0
      %p59 = por %p57, %p58
      %p60 = scmp.ne.s32.totalorder %s48, %s49
      %p61 = scmp.eq.s32.totalorder %s18, 1
      %p62 = por %p60, %p61
      %p64 = scmp.ne.s32.totalorder %s49, %s63
      %p65 = scmp.eq.s32.totalorder %s18, 0
      %p66 = por %p64, %p65
      %s68 = sadd.s32 %s67, 1
      %p71 = scmp.eq.s32.totalorder %s12, 1
      %p72 = scmp.ne.s32.totalorder %s67, %s69
      %p73 = scmp.eq.s32.totalorder %s12, 0
      %p74 = por %p72, %p73
      %p75 = scmp.ne.s32.totalorder %s67, %s69
      %p76 = scmp.eq.s32.totalorder %s17, 1
      %p77 = por %p75, %p76
      %p78 = scmp.ne.s32.totalorder %s69, %s70
      %p79 = scmp.eq.s32.totalorder %s17, 0
      %p80 = por %p78, %p79
      %p81 = scmp.ne.s32.totalorder %s69, %s70
      %p82 = scmp.eq.s32.totalorder %s18, 1
      %p83 = por %p81, %p82
      %p85 = scmp.ne.s32.totalorder %s70, %s84
      %p86 = scmp.eq.s32.totalorder %s18, 0
      %p87 = por %p85, %p86
      %s88 = ssub.s32 %s12, %s19
      %p89 = scmp.eq.s32.totalorder %s88, 0
      %s91 = sadd.s32 %s90, 1
      %s92 = scalar_select %p89, %s90, %s91
      %p95 = pneg %p89
      %p96 = scmp.eq.s32.totalorder %s12, 1
      %p97 = por %p95, %p96
      %p98 = scmp.ne.s32.totalorder %s90, %s93
      %p99 = scmp.eq.s32.totalorder %s12, 0
      %p100 = por %p98, %p99
      %p101 = scmp.ne.s32.totalorder %s90, %s93
      %p102 = scmp.eq.s32.totalorder %s17, 1
      %p103 = por %p101, %p102
      %p104 = scmp.ne.s32.totalorder %s93, %s94
      %p105 = scmp.eq.s32.totalorder %s17, 0
      %p106 = por %p104, %p105
      %p107 = scmp.ne.s32.totalorder %s93, %s94
      %p108 = scmp.eq.s32.totalorder %s18, 1
      %p109 = por %p107, %p108
      %p111 = scmp.ne.s32.totalorder %s94, %s110
      %p112 = scmp.eq.s32.totalorder %s18, 0
      %p113 = por %p111, %p112
      %p114 = scmp.le.s32.totalorder 1, %s12
      %p115 = scmp.lt.s32.totalorder %s12, 3
      %p116 = pnand %p114, %p115
      %p117 = pneg %p116
      // Predicated region
      $region9: #{tpu_custom_call.1} parent=5 // pred_check
        _
      $region10: #{tpu_custom_call.1} parent=5 // pred_check_branch
        %119 = sbr.rel (%p116) target = $region12
      $region11: #{tpu_custom_call.1} parent=5 // pred_region
        %s120 = ssub.s32 %s12, 1
        // Predicated region
        $region13: #{tpu_custom_call.1} parent=11 // pred_check
          %p121 = pneg %p59
        $region14: #{tpu_custom_call.1} parent=11 // pred_check_branch
          %123 = sbr.rel (%p121) target = $region16
        $region15: #{tpu_custom_call.1} parent=11 // pred_region
          _
        $region16: #{tpu_custom_call.1} parent=11 // pred_fallthru
          _
        // Predicated region
        $region17: #{tpu_custom_call.1} parent=11 // pred_check
          %p124 = pneg %p80
        $region18: #{tpu_custom_call.1} parent=11 // pred_check_branch
          %126 = sbr.rel (%p124) target = $region20
        $region19: #{tpu_custom_call.1} parent=11 // pred_region
          _
        $region20: #{tpu_custom_call.1} parent=11 // pred_fallthru
          _
      $region12: #{tpu_custom_call.1} parent=5 // pred_fallthru
        _
      %p127 = scmp.lt.s32.totalorder %s12, 2
      // Predicated region
      $region21: #{tpu_custom_call.1} parent=5 // pred_check
        %p128 = pneg %p127
      $region22: #{tpu_custom_call.1} parent=5 // pred_check_branch
        %130 = sbr.rel (%p128) target = $region24
      $region23: #{tpu_custom_call.1} parent=5 // pred_region
        // Predicated region
        $region25: #{tpu_custom_call.1} parent=23 // pred_check
          %p131 = pneg %p32
        $region26: #{tpu_custom_call.1} parent=23 // pred_check_branch
          %133 = sbr.rel (%p131) target = $region28
        $region27: #{tpu_custom_call.1} parent=23 // pred_region
          %s134 = smul.u32 32, %s12
          %p135 = scmp.lt.s32.totalorder %s134, 63
          %s136 = scalar_select %p135, %s134, 63
          %s137 = smul.addr %s136, 8
          %s138 = scalar_lea.vmem %s0, %s137
          %s139 = smul.u32 32, %s12
        $region28: #{tpu_custom_call.1} parent=23 // pred_fallthru
          _
      $region24: #{tpu_custom_call.1} parent=5 // pred_fallthru
        _
      %p140 = scmp.le.s32.totalorder 1, %s12
      %p141 = scmp.lt.s32.totalorder %s12, 3
      %p142 = pnand %p140, %p141
      %p143 = pneg %p142
      // Predicated region
      $region29: #{tpu_custom_call.1} parent=5 // pred_check
        _
      $region30: #{tpu_custom_call.1} parent=5 // pred_check_branch
        %145 = sbr.rel (%p142) target = $region32
      $region31: #{tpu_custom_call.1} parent=5 // pred_region
        %s146 = ssub.s32 %s12, 1
        %s147 = smul.u32 32, %s17
        %p148 = scmp.lt.s32.totalorder %s147, 63
        %s149 = scalar_select %p148, %s147, 63
        %s150 = smul.addr %s149, 8
        %s151 = scalar_lea.vmem %s0, %s150
        %p152 = pneg %p38
        %p153 = pneg %p35
        %p154 = pneg %p59
        %p155 = pneg %p56
        %p156 = pneg %p80
        %p157 = pneg %p77
        %p158 = pneg %p106
        %p159 = pneg %p103
        %s160 = sand.u32 %s93, 1
        %s161 = scalar_lea.sflag [#allocation3], %s160
        %s162 = sand.u32 %s93, 1
        %s163 = smul.addr %s162, 256
        %s164 = scalar_lea.vmem [#allocation2], %s163
        %s165 = smul.u32 32, %s17
        %p166 = scmp.lt.s32.totalorder %s165, 63
        %s167 = scalar_select %p166, %s165, 63
        %s168 = smul.addr %s167, 8
        %s169 = scalar_lea.vmem %s0, %s168
        %s170 = smul.u32 32, %s17
        %s171 = smul.u32 32, %s17
        %v172 = vld [vmem:[%s169] sm:$0xff]
        %v173 = vld [vmem:[%s169 + $0x8] sm:$0xff]
        %v174 = vld [vmem:[%s169 + $0x10] sm:$0xff]
        %v175 = vld [vmem:[%s169 + $0x18] sm:$0xff]
        %v176 = vld [vmem:[%s169 + $0x20] sm:$0xff]
        %v177 = vld [vmem:[%s169 + $0x28] sm:$0xff]
        %v178 = vld [vmem:[%s169 + $0x30] sm:$0xff]
        %v179 = vld [vmem:[%s169 + $0x38] sm:$0xff]
        %v180 = vld [vmem:[%s169 + $0x40] sm:$0xff]
        %v181 = vld [vmem:[%s169 + $0x48] sm:$0xff]
        %v182 = vld [vmem:[%s169 + $0x50] sm:$0xff]
        %v183 = vld [vmem:[%s169 + $0x58] sm:$0xff]
        %v184 = vld [vmem:[%s169 + $0x60] sm:$0xff]
        %v185 = vld [vmem:[%s169 + $0x68] sm:$0xff]
        %v186 = vld [vmem:[%s169 + $0x70] sm:$0xff]
        %v187 = vld [vmem:[%s169 + $0x78] sm:$0xff]
        %v188 = vld [vmem:[%s169 + $0x80] sm:$0xff]
        %v189 = vld [vmem:[%s169 + $0x88] sm:$0xff]
        %v190 = vld [vmem:[%s169 + $0x90] sm:$0xff]
        %v191 = vld [vmem:[%s169 + $0x98] sm:$0xff]
        %v192 = vld [vmem:[%s169 + $0xa0] sm:$0xff]
        %v193 = vld [vmem:[%s169 + $0xa8] sm:$0xff]
        %v194 = vld [vmem:[%s169 + $0xb0] sm:$0xff]
        %v195 = vld [vmem:[%s169 + $0xb8] sm:$0xff]
        %v196 = vld [vmem:[%s169 + $0xc0] sm:$0xff]
        %v197 = vld [vmem:[%s169 + $0xc8] sm:$0xff]
        %v198 = vld [vmem:[%s169 + $0xd0] sm:$0xff]
        %v199 = vld [vmem:[%s169 + $0xd8] sm:$0xff]
        %v200 = vld [vmem:[%s169 + $0xe0] sm:$0xff]
        %v201 = vld [vmem:[%s169 + $0xe8] sm:$0xff]
        %v202 = vld [vmem:[%s169 + $0xf0] sm:$0xff]
        %v203 = vld [vmem:[%s169 + $0xf8] sm:$0xff]
        %v204 = vld [vmem:[%s1] sm:$0xff]
        %v205 = vld [vmem:[%s2] sm:$0x1]
        %v206 = vlaneseq
        %v207 = vshrl.u32 %v206, 7
        %v208 = vsub.s32 0, %v207
        %v209 = vrot.slane %v205, %v208
        %vm210 = vcmask 64512
        %v212 = vsel %vm210, %v172, 0
        %v215 = vsel %vm210, %v173, 0
        %v218 = vsel %vm210, %v174, 0
        %v221 = vsel %vm210, %v175, 0
        %v224 = vsel %vm210, %v176, 0
        %v227 = vsel %vm210, %v177, 0
        %v230 = vsel %vm210, %v178, 0
        %v233 = vsel %vm210, %v179, 0
        %v236 = vsel %vm210, %v180, 0
        %v239 = vsel %vm210, %v181, 0
        %v242 = vsel %vm210, %v182, 0
        %v245 = vsel %vm210, %v183, 0
        %v248 = vsel %vm210, %v184, 0
        %v251 = vsel %vm210, %v185, 0
        %v254 = vsel %vm210, %v186, 0
        %v257 = vsel %vm210, %v187, 0
        %v260 = vsel %vm210, %v188, 0
        %v263 = vsel %vm210, %v189, 0
        %v266 = vsel %vm210, %v190, 0
        %v269 = vsel %vm210, %v191, 0
        %v272 = vsel %vm210, %v192, 0
        %v275 = vsel %vm210, %v193, 0
        %v278 = vsel %vm210, %v194, 0
        %v281 = vsel %vm210, %v195, 0
        %v284 = vsel %vm210, %v196, 0
        %v287 = vsel %vm210, %v197, 0
        %v290 = vsel %vm210, %v198, 0
        %v293 = vsel %vm210, %v199, 0
        %v296 = vsel %vm210, %v200, 0
        %v299 = vsel %vm210, %v201, 0
        %v302 = vsel %vm210, %v202, 0
        %v305 = vsel %vm210, %v203, 0
        %307 = vmatprep.subr.mxu0 0.0
        %308 = vmatpush1.msra.mxu0 %v204
        %309 = vmatprep.subr.mxu0 0.0
        %310 = vmatpush1.msra.mxu0 0.0
        %311 = vmatprep.subr.mxu0 0.0
        %312 = vmatpush1.msra.mxu0 0.0
        %313 = vmatprep.subr.mxu0 0.0
        %314 = vmatpush1.msra.mxu0 0.0
        %315 = vmatprep.subr.mxu0 0.0
        %316 = vmatpush1.msra.mxu0 0.0
        %317 = vmatprep.subr.mxu0 0.0
        %318 = vmatpush1.msra.mxu0 0.0
        %319 = vmatprep.subr.mxu0 0.0
        %320 = vmatpush1.msra.mxu0 0.0
        %321 = vmatprep.subr.mxu0 0.0
        %322 = vmatpush1.msra.mxu0 0.0
        %323 = vmatprep.subr.mxu0 0.0
        %324 = vmatpush1.msra.mxu0 0.0
        %325 = vmatprep.subr.mxu0 0.0
        %326 = vmatpush1.msra.mxu0 0.0
        %327 = vmatprep.subr.mxu0 0.0
        %328 = vmatpush1.msra.mxu0 0.0
        %329 = vmatprep.subr.mxu0 0.0
        %330 = vmatpush1.msra.mxu0 0.0
        %331 = vmatprep.subr.mxu0 0.0
        %332 = vmatpush1.msra.mxu0 0.0
        %333 = vmatprep.subr.mxu0 0.0
        %334 = vmatpush1.msra.mxu0 0.0
        %335 = vmatprep.subr.mxu0 0.0
        %336 = vmatpush1.msra.mxu0 0.0
        %337 = vmatprep.subr.mxu0 0.0
        %338 = vmatpush1.msra.mxu0 0.0
        %339 = vmatprep.subr.mxu0 0.0
        %340 = vmatpush1.msra.mxu0 0.0
        %341 = vmatprep.subr.mxu0 0.0
        %342 = vmatpush1.msra.mxu0 0.0
        %343 = vmatprep.subr.mxu0 0.0
        %344 = vmatpush1.msra.mxu0 0.0
        %345 = vmatprep.subr.mxu0 0.0
        %346 = vmatpush1.msra.mxu0 0.0
        %347 = vmatprep.subr.mxu0 0.0
        %348 = vmatpush1.msra.mxu0 0.0
        %349 = vmatprep.subr.mxu0 0.0
        %350 = vmatpush1.msra.mxu0 0.0
        %351 = vmatprep.subr.mxu0 0.0
        %352 = vmatpush1.msra.mxu0 0.0
        %353 = vmatprep.subr.mxu0 0.0
        %354 = vmatpush1.msra.mxu0 0.0
        %355 = vmatprep.subr.mxu0 0.0
        %356 = vmatpush1.msra.mxu0 0.0
        %357 = vmatprep.subr.mxu0 0.0
        %358 = vmatpush1.msra.mxu0 0.0
        %359 = vmatprep.subr.mxu0 0.0
        %360 = vmatpush1.msra.mxu0 0.0
        %361 = vmatprep.subr.mxu0 0.0
        %362 = vmatpush1.msra.mxu0 0.0
        %363 = vmatprep.subr.mxu0 0.0
        %364 = vmatpush1.msra.mxu0 0.0
        %365 = vmatprep.subr.mxu0 0.0
        %366 = vmatpush1.msra.mxu0 0.0
        %367 = vmatprep.subr.mxu0 0.0
        %368 = vmatpush1.msra.mxu0 0.0
        %369 = vmatprep.subr.mxu0 0.0
        %370 = vmatpush1.msra.mxu0 0.0
        %371 = vmatprep.mubr.f32.mxu0 0.0
        %372 = vmatmul.mubr.f32.gmra.mrb[0].mxu0 %v212
        %v373 = vpop.f32.mrb[0].mxu0
        %v374 = vadd.f32 %v209, %v373
        %v375 = vpop.f32.mrb[0].mxu0
        %376 = vmatprep.mubr.f32.mxu0 0.0
        %377 = vmatmul.mubr.f32.gmra.mrb[0].mxu0 %v215
        %v378 = vpop.f32.mrb[0].mxu0
        %v379 = vadd.f32 %v209, %v378
        %v380 = vpop.f32.mrb[0].mxu0
        %381 = vmatprep.mubr.f32.mxu0 0.0
        %382 = vmatmul.mubr.f32.gmra.mrb[0].mxu0 %v218
        %v383 = vpop.f32.mrb[0].mxu0
        %v384 = vadd.f32 %v209, %v383
        %v385 = vpop.f32.mrb[0].mxu0
        %386 = vmatprep.mubr.f32.mxu0 0.0
        %387 = vmatmul.mubr.f32.gmra.mrb[0].mxu0 %v221
        %v388 = vpop.f32.mrb[0].mxu0
        %v389 = vadd.f32 %v209, %v388
        %v390 = vpop.f32.mrb[0].mxu0
        %391 = vmatprep.mubr.f32.mxu0 0.0
        %392 = vmatmul.mubr.f32.gmra.mrb[0].mxu0 %v224
        %v393 = vpop.f32.mrb[0].mxu0
        %v394 = vadd.f32 %v209, %v393
        %v395 = vpop.f32.mrb[0].mxu0
        %396 = vmatprep.mubr.f32.mxu0 0.0
        %397 = vmatmul.mubr.f32.gmra.mrb[0].mxu0 %v227
        %v398 = vpop.f32.mrb[0].mxu0
        %v399 = vadd.f32 %v209, %v398
        %v400 = vpop.f32.mrb[0].mxu0
        %401 = vmatprep.mubr.f32.mxu0 0.0
        %402 = vmatmul.mubr.f32.gmra.mrb[0].mxu0 %v230
        %v403 = vpop.f32.mrb[0].mxu0
        %v404 = vadd.f32 %v209, %v403
        %v405 = vpop.f32.mrb[0].mxu0
        %406 = vmatprep.mubr.f32.mxu0 0.0
        %407 = vmatmul.mubr.f32.gmra.mrb[0].mxu0 %v233
        %v408 = vpop.f32.mrb[0].mxu0
        %v409 = vadd.f32 %v209, %v408
        %v410 = vpop.f32.mrb[0].mxu0
        %411 = vmatprep.mubr.f32.mxu0 0.0
        %412 = vmatmul.mubr.f32.gmra.mrb[0].mxu0 %v236
        %v413 = vpop.f32.mrb[0].mxu0
        %v414 = vadd.f32 %v209, %v413
        %v415 = vpop.f32.mrb[0].mxu0
        %416 = vmatprep.mubr.f32.mxu0 0.0
        %417 = vmatmul.mubr.f32.gmra.mrb[0].mxu0 %v239
        %v418 = vpop.f32.mrb[0].mxu0
        %v419 = vadd.f32 %v209, %v418
        %v420 = vpop.f32.mrb[0].mxu0
        %421 = vmatprep.mubr.f32.mxu0 0.0
        %422 = vmatmul.mubr.f32.gmra.mrb[0].mxu0 %v242
        %v423 = vpop.f32.mrb[0].mxu0
        %v424 = vadd.f32 %v209, %v423
        %v425 = vpop.f32.mrb[0].mxu0
        %426 = vmatprep.mubr.f32.mxu0 0.0
        %427 = vmatmul.mubr.f32.gmra.mrb[0].mxu0 %v245
        %v428 = vpop.f32.mrb[0].mxu0
        %v429 = vadd.f32 %v209, %v428
        %v430 = vpop.f32.mrb[0].mxu0
        %431 = vmatprep.mubr.f32.mxu0 0.0
        %432 = vmatmul.mubr.f32.gmra.mrb[0].mxu0 %v248
        %v433 = vpop.f32.mrb[0].mxu0
        %v434 = vadd.f32 %v209, %v433
        %v435 = vpop.f32.mrb[0].mxu0
        %436 = vmatprep.mubr.f32.mxu0 0.0
        %437 = vmatmul.mubr.f32.gmra.mrb[0].mxu0 %v251
        %v438 = vpop.f32.mrb[0].mxu0
        %v439 = vadd.f32 %v209, %v438
        %v440 = vpop.f32.mrb[0].mxu0
        %441 = vmatprep.mubr.f32.mxu0 0.0
        %442 = vmatmul.mubr.f32.gmra.mrb[0].mxu0 %v254
        %v443 = vpop.f32.mrb[0].mxu0
        %v444 = vadd.f32 %v209, %v443
        %v445 = vpop.f32.mrb[0].mxu0
        %446 = vmatprep.mubr.f32.mxu0 0.0
        %447 = vmatmul.mubr.f32.gmra.mrb[0].mxu0 %v257
        %v448 = vpop.f32.mrb[0].mxu0
        %v449 = vadd.f32 %v209, %v448
        %v450 = vpop.f32.mrb[0].mxu0
        %451 = vmatprep.mubr.f32.mxu0 0.0
        %452 = vmatmul.mubr.f32.gmra.mrb[0].mxu0 %v260
        %v453 = vpop.f32.mrb[0].mxu0
        %v454 = vadd.f32 %v209, %v453
        %v455 = vpop.f32.mrb[0].mxu0
        %456 = vmatprep.mubr.f32.mxu0 0.0
        %457 = vmatmul.mubr.f32.gmra.mrb[0].mxu0 %v263
        %v458 = vpop.f32.mrb[0].mxu0
        %v459 = vadd.f32 %v209, %v458
        %v460 = vpop.f32.mrb[0].mxu0
        %461 = vmatprep.mubr.f32.mxu0 0.0
        %462 = vmatmul.mubr.f32.gmra.mrb[0].mxu0 %v266
        %v463 = vpop.f32.mrb[0].mxu0
        %v464 = vadd.f32 %v209, %v463
        %v465 = vpop.f32.mrb[0].mxu0
        %466 = vmatprep.mubr.f32.mxu0 0.0
        %467 = vmatmul.mubr.f32.gmra.mrb[0].mxu0 %v269
        %v468 = vpop.f32.mrb[0].mxu0
        %v469 = vadd.f32 %v209, %v468
        %v470 = vpop.f32.mrb[0].mxu0
        %471 = vmatprep.mubr.f32.mxu0 0.0
        %472 = vmatmul.mubr.f32.gmra.mrb[0].mxu0 %v272
        %v473 = vpop.f32.mrb[0].mxu0
        %v474 = vadd.f32 %v209, %v473
        %v475 = vpop.f32.mrb[0].mxu0
        %476 = vmatprep.mubr.f32.mxu0 0.0
        %477 = vmatmul.mubr.f32.gmra.mrb[0].mxu0 %v275
        %v478 = vpop.f32.mrb[0].mxu0
        %v479 = vadd.f32 %v209, %v478
        %v480 = vpop.f32.mrb[0].mxu0
        %481 = vmatprep.mubr.f32.mxu0 0.0
        %482 = vmatmul.mubr.f32.gmra.mrb[0].mxu0 %v278
        %v483 = vpop.f32.mrb[0].mxu0
        %v484 = vadd.f32 %v209, %v483
        %v485 = vpop.f32.mrb[0].mxu0
        %486 = vmatprep.mubr.f32.mxu0 0.0
        %487 = vmatmul.mubr.f32.gmra.mrb[0].mxu0 %v281
        %v488 = vpop.f32.mrb[0].mxu0
        %v489 = vadd.f32 %v209, %v488
        %v490 = vpop.f32.mrb[0].mxu0
        %491 = vmatprep.mubr.f32.mxu0 0.0
        %492 = vmatmul.mubr.f32.gmra.mrb[0].mxu0 %v284
        %v493 = vpop.f32.mrb[0].mxu0
        %v494 = vadd.f32 %v209, %v493
        %v495 = vpop.f32.mrb[0].mxu0
        %496 = vmatprep.mubr.f32.mxu0 0.0
        %497 = vmatmul.mubr.f32.gmra.mrb[0].mxu0 %v287
        %v498 = vpop.f32.mrb[0].mxu0
        %v499 = vadd.f32 %v209, %v498
        %v500 = vpop.f32.mrb[0].mxu0
        %501 = vmatprep.mubr.f32.mxu0 0.0
        %502 = vmatmul.mubr.f32.gmra.mrb[0].mxu0 %v290
        %v503 = vpop.f32.mrb[0].mxu0
        %v504 = vadd.f32 %v209, %v503
        %v505 = vpop.f32.mrb[0].mxu0
        %506 = vmatprep.mubr.f32.mxu0 0.0
        %507 = vmatmul.mubr.f32.gmra.mrb[0].mxu0 %v293
        %v508 = vpop.f32.mrb[0].mxu0
        %v509 = vadd.f32 %v209, %v508
        %v510 = vpop.f32.mrb[0].mxu0
        %511 = vmatprep.mubr.f32.mxu0 0.0
        %512 = vmatmul.mubr.f32.gmra.mrb[0].mxu0 %v296
        %v513 = vpop.f32.mrb[0].mxu0
        %v514 = vadd.f32 %v209, %v513
        %v515 = vpop.f32.mrb[0].mxu0
        %516 = vmatprep.mubr.f32.mxu0 0.0
        %517 = vmatmul.mubr.f32.gmra.mrb[0].mxu0 %v299
        %v518 = vpop.f32.mrb[0].mxu0
        %v519 = vadd.f32 %v209, %v518
        %v520 = vpop.f32.mrb[0].mxu0
        %521 = vmatprep.mubr.f32.mxu0 0.0
        %522 = vmatmul.mubr.f32.gmra.mrb[0].mxu0 %v302
        %v523 = vpop.f32.mrb[0].mxu0
        %v524 = vadd.f32 %v209, %v523
        %v525 = vpop.f32.mrb[0].mxu0
        %526 = vmatprep.mubr.f32.mxu0 0.0
        %527 = vmatmul.mubr.f32.gmra.mrb[0].mxu0 %v305
        %v528 = vpop.f32.mrb[0].mxu0
        %v529 = vadd.f32 %v209, %v528
        %v530 = vpop.f32.mrb[0].mxu0
        %531 = vdwg.mxu0
        %v532 = vmax.f32 %v374, 0.0
        %v533 = vmax.f32 %v379, 0.0
        %v534 = vmax.f32 %v384, 0.0
        %v535 = vmax.f32 %v389, 0.0
        %v536 = vmax.f32 %v394, 0.0
        %v537 = vmax.f32 %v399, 0.0
        %v538 = vmax.f32 %v404, 0.0
        %v539 = vmax.f32 %v409, 0.0
        %v540 = vmax.f32 %v414, 0.0
        %v541 = vmax.f32 %v419, 0.0
        %v542 = vmax.f32 %v424, 0.0
        %v543 = vmax.f32 %v429, 0.0
        %v544 = vmax.f32 %v434, 0.0
        %v545 = vmax.f32 %v439, 0.0
        %v546 = vmax.f32 %v444, 0.0
        %v547 = vmax.f32 %v449, 0.0
        %v548 = vmax.f32 %v454, 0.0
        %v549 = vmax.f32 %v459, 0.0
        %v550 = vmax.f32 %v464, 0.0
        %v551 = vmax.f32 %v469, 0.0
        %v552 = vmax.f32 %v474, 0.0
        %v553 = vmax.f32 %v479, 0.0
        %v554 = vmax.f32 %v484, 0.0
        %v555 = vmax.f32 %v489, 0.0
        %v556 = vmax.f32 %v494, 0.0
        %v557 = vmax.f32 %v499, 0.0
        %v558 = vmax.f32 %v504, 0.0
        %v559 = vmax.f32 %v509, 0.0
        %v560 = vmax.f32 %v514, 0.0
        %v561 = vmax.f32 %v519, 0.0
        %v562 = vmax.f32 %v524, 0.0
        %v563 = vmax.f32 %v529, 0.0
        %v564 = vld [vmem:[%s1 + $0x8] sm:$0xff]
        %v565 = vld [vmem:[%s1 + $0x10] sm:$0xff]
        %v566 = vld [vmem:[%s2 + $0x1] sm:$0x1]
        %v567 = vlaneseq
        %v568 = vshrl.u32 %v567, 7
        %v569 = vsub.s32 0, %v568
        %v570 = vrot.slane %v566, %v569
        %vm571 = vcmask 130048
        %v573 = vsel %vm571, %v532, 0
        %v576 = vsel %vm571, %v533, 0
        %v579 = vsel %vm571, %v534, 0
        %v582 = vsel %vm571, %v535, 0
        %v585 = vsel %vm571, %v536, 0
        %v588 = vsel %vm571, %v537, 0
        %v591 = vsel %vm571, %v538, 0
        %v594 = vsel %vm571, %v539, 0
        %v597 = vsel %vm571, %v540, 0
        %v600 = vsel %vm571, %v541, 0
        %v603 = vsel %vm571, %v542, 0
        %v606 = vsel %vm571, %v543, 0
        %v609 = vsel %vm571, %v544, 0
        %v612 = vsel %vm571, %v545, 0
        %v615 = vsel %vm571, %v546, 0
        %v618 = vsel %vm571, %v547, 0
        %v621 = vsel %vm571, %v548, 0
        %v624 = vsel %vm571, %v549, 0
        %v627 = vsel %vm571, %v550, 0
        %v630 = vsel %vm571, %v551, 0
        %v633 = vsel %vm571, %v552, 0
        %v636 = vsel %vm571, %v553, 0
        %v639 = vsel %vm571, %v554, 0
        %v642 = vsel %vm571, %v555, 0
        %v645 = vsel %vm571, %v556, 0
        %v648 = vsel %vm571, %v557, 0
        %v651 = vsel %vm571, %v558, 0
        %v654 = vsel %vm571, %v559, 0
        %v657 = vsel %vm571, %v560, 0
        %v660 = vsel %vm571, %v561, 0
        %v663 = vsel %vm571, %v562, 0
        %v666 = vsel %vm571, %v563, 0
        %668 = vmatprep.subr.mxu0 0.0
        %669 = vmatpush1.msra.mxu0 %v564
        %670 = vmatprep.subr.mxu0 0.0
        %671 = vmatpush1.msra.mxu0 %v565
        %672 = vmatprep.subr.mxu0 0.0
        %673 = vmatpush1.msra.mxu0 0.0
        %674 = vmatprep.subr.mxu0 0.0
        %675 = vmatpush1.msra.mxu0 0.0
        %676 = vmatprep.subr.mxu0 0.0
        %677 = vmatpush1.msra.mxu0 0.0
        %678 = vmatprep.subr.mxu0 0.0
        %679 = vmatpush1.msra.mxu0 0.0
        %680 = vmatprep.subr.mxu0 0.0
        %681 = vmatpush1.msra.mxu0 0.0
        %682 = vmatprep.subr.mxu0 0.0
        %683 = vmatpush1.msra.mxu0 0.0
        %684 = vmatprep.subr.mxu0 0.0
        %685 = vmatpush1.msra.mxu0 0.0
        %686 = vmatprep.subr.mxu0 0.0
        %687 = vmatpush1.msra.mxu0 0.0
        %688 = vmatprep.subr.mxu0 0.0
        %689 = vmatpush1.msra.mxu0 0.0
        %690 = vmatprep.subr.mxu0 0.0
        %691 = vmatpush1.msra.mxu0 0.0
        %692 = vmatprep.subr.mxu0 0.0
        %693 = vmatpush1.msra.mxu0 0.0
        %694 = vmatprep.subr.mxu0 0.0
        %695 = vmatpush1.msra.mxu0 0.0
        %696 = vmatprep.subr.mxu0 0.0
        %697 = vmatpush1.msra.mxu0 0.0
        %698 = vmatprep.subr.mxu0 0.0
        %699 = vmatpush1.msra.mxu0 0.0
        %700 = vmatprep.subr.mxu0 0.0
        %701 = vmatpush1.msra.mxu0 0.0
        %702 = vmatprep.subr.mxu0 0.0
        %703 = vmatpush1.msra.mxu0 0.0
        %704 = vmatprep.subr.mxu0 0.0
        %705 = vmatpush1.msra.mxu0 0.0
        %706 = vmatprep.subr.mxu0 0.0
        %707 = vmatpush1.msra.mxu0 0.0
        %708 = vmatprep.subr.mxu0 0.0
        %709 = vmatpush1.msra.mxu0 0.0
        %710 = vmatprep.subr.mxu0 0.0
        %711 = vmatpush1.msra.mxu0 0.0
        %712 = vmatprep.subr.mxu0 0.0
        %713 = vmatpush1.msra.mxu0 0.0
        %714 = vmatprep.subr.mxu0 0.0
        %715 = vmatpush1.msra.mxu0 0.0
        %716 = vmatprep.subr.mxu0 0.0
        %717 = vmatpush1.msra.mxu0 0.0
        %718 = vmatprep.subr.mxu0 0.0
        %719 = vmatpush1.msra.mxu0 0.0
        %720 = vmatprep.subr.mxu0 0.0
        %721 = vmatpush1.msra.mxu0 0.0
        %722 = vmatprep.subr.mxu0 0.0
        %723 = vmatpush1.msra.mxu0 0.0
        %724 = vmatprep.subr.mxu0 0.0
        %725 = vmatpush1.msra.mxu0 0.0
        %726 = vmatprep.subr.mxu0 0.0
        %727 = vmatpush1.msra.mxu0 0.0
        %728 = vmatprep.subr.mxu0 0.0
        %729 = vmatpush1.msra.mxu0 0.0
        %730 = vmatprep.subr.mxu0 0.0
        %731 = vmatpush1.msra.mxu0 0.0
        %732 = vmatprep.mubr.f32.mxu0 0.0
        %733 = vmatmul.mubr.f32.gmra.mrb[0].mxu0 %v573
        %v734 = vpop.f32.mrb[0].mxu0
        %v735 = vadd.f32 %v570, %v734
        %v736 = vpop.f32.mrb[0].mxu0
        %737 = vmatprep.mubr.f32.mxu0 0.0
        %738 = vmatmul.mubr.f32.gmra.mrb[0].mxu0 %v576
        %v739 = vpop.f32.mrb[0].mxu0
        %v740 = vadd.f32 %v570, %v739
        %v741 = vpop.f32.mrb[0].mxu0
        %742 = vmatprep.mubr.f32.mxu0 0.0
        %743 = vmatmul.mubr.f32.gmra.mrb[0].mxu0 %v579
        %v744 = vpop.f32.mrb[0].mxu0
        %v745 = vadd.f32 %v570, %v744
        %v746 = vpop.f32.mrb[0].mxu0
        %747 = vmatprep.mubr.f32.mxu0 0.0
        %748 = vmatmul.mubr.f32.gmra.mrb[0].mxu0 %v582
        %v749 = vpop.f32.mrb[0].mxu0
        %v750 = vadd.f32 %v570, %v749
        %v751 = vpop.f32.mrb[0].mxu0
        %752 = vmatprep.mubr.f32.mxu0 0.0
        %753 = vmatmul.mubr.f32.gmra.mrb[0].mxu0 %v585
        %v754 = vpop.f32.mrb[0].mxu0
        %v755 = vadd.f32 %v570, %v754
        %v756 = vpop.f32.mrb[0].mxu0
        %757 = vmatprep.mubr.f32.mxu0 0.0
        %758 = vmatmul.mubr.f32.gmra.mrb[0].mxu0 %v588
        %v759 = vpop.f32.mrb[0].mxu0
        %v760 = vadd.f32 %v570, %v759
        %v761 = vpop.f32.mrb[0].mxu0
        %762 = vmatprep.mubr.f32.mxu0 0.0
        %763 = vmatmul.mubr.f32.gmra.mrb[0].mxu0 %v591
        %v764 = vpop.f32.mrb[0].mxu0
        %v765 = vadd.f32 %v570, %v764
        %v766 = vpop.f32.mrb[0].mxu0
        %767 = vmatprep.mubr.f32.mxu0 0.0
        %768 = vmatmul.mubr.f32.gmra.mrb[0].mxu0 %v594
        %v769 = vpop.f32.mrb[0].mxu0
        %v770 = vadd.f32 %v570, %v769
        %v771 = vpop.f32.mrb[0].mxu0
        %772 = vmatprep.mubr.f32.mxu0 0.0
        %773 = vmatmul.mubr.f32.gmra.mrb[0].mxu0 %v597
        %v774 = vpop.f32.mrb[0].mxu0
        %v775 = vadd.f32 %v570, %v774
        %v776 = vpop.f32.mrb[0].mxu0
        %777 = vmatprep.mubr.f32.mxu0 0.0
        %778 = vmatmul.mubr.f32.gmra.mrb[0].mxu0 %v600
        %v779 = vpop.f32.mrb[0].mxu0
        %v780 = vadd.f32 %v570, %v779
        %v781 = vpop.f32.mrb[0].mxu0
        %782 = vmatprep.mubr.f32.mxu0 0.0
        %783 = vmatmul.mubr.f32.gmra.mrb[0].mxu0 %v603
        %v784 = vpop.f32.mrb[0].mxu0
        %v785 = vadd.f32 %v570, %v784
        %v786 = vpop.f32.mrb[0].mxu0
        %787 = vmatprep.mubr.f32.mxu0 0.0
        %788 = vmatmul.mubr.f32.gmra.mrb[0].mxu0 %v606
        %v789 = vpop.f32.mrb[0].mxu0
        %v790 = vadd.f32 %v570, %v789
        %v791 = vpop.f32.mrb[0].mxu0
        %792 = vmatprep.mubr.f32.mxu0 0.0
        %793 = vmatmul.mubr.f32.gmra.mrb[0].mxu0 %v609
        %v794 = vpop.f32.mrb[0].mxu0
        %v795 = vadd.f32 %v570, %v794
        %v796 = vpop.f32.mrb[0].mxu0
        %797 = vmatprep.mubr.f32.mxu0 0.0
        %798 = vmatmul.mubr.f32.gmra.mrb[0].mxu0 %v612
        %v799 = vpop.f32.mrb[0].mxu0
        %v800 = vadd.f32 %v570, %v799
        %v801 = vpop.f32.mrb[0].mxu0
        %802 = vmatprep.mubr.f32.mxu0 0.0
        %803 = vmatmul.mubr.f32.gmra.mrb[0].mxu0 %v615
        %v804 = vpop.f32.mrb[0].mxu0
        %v805 = vadd.f32 %v570, %v804
        %v806 = vpop.f32.mrb[0].mxu0
        %807 = vmatprep.mubr.f32.mxu0 0.0
        %808 = vmatmul.mubr.f32.gmra.mrb[0].mxu0 %v618
        %v809 = vpop.f32.mrb[0].mxu0
        %v810 = vadd.f32 %v570, %v809
        %v811 = vpop.f32.mrb[0].mxu0
        %812 = vmatprep.mubr.f32.mxu0 0.0
        %813 = vmatmul.mubr.f32.gmra.mrb[0].mxu0 %v621
        %v814 = vpop.f32.mrb[0].mxu0
        %v815 = vadd.f32 %v570, %v814
        %v816 = vpop.f32.mrb[0].mxu0
        %817 = vmatprep.mubr.f32.mxu0 0.0
        %818 = vmatmul.mubr.f32.gmra.mrb[0].mxu0 %v624
        %v819 = vpop.f32.mrb[0].mxu0
        %v820 = vadd.f32 %v570, %v819
        %v821 = vpop.f32.mrb[0].mxu0
        %822 = vmatprep.mubr.f32.mxu0 0.0
        %823 = vmatmul.mubr.f32.gmra.mrb[0].mxu0 %v627
        %v824 = vpop.f32.mrb[0].mxu0
        %v825 = vadd.f32 %v570, %v824
        %v826 = vpop.f32.mrb[0].mxu0
        %827 = vmatprep.mubr.f32.mxu0 0.0
        %828 = vmatmul.mubr.f32.gmra.mrb[0].mxu0 %v630
        %v829 = vpop.f32.mrb[0].mxu0
        %v830 = vadd.f32 %v570, %v829
        %v831 = vpop.f32.mrb[0].mxu0
        %832 = vmatprep.mubr.f32.mxu0 0.0
        %833 = vmatmul.mubr.f32.gmra.mrb[0].mxu0 %v633
        %v834 = vpop.f32.mrb[0].mxu0
        %v835 = vadd.f32 %v570, %v834
        %v836 = vpop.f32.mrb[0].mxu0
        %837 = vmatprep.mubr.f32.mxu0 0.0
        %838 = vmatmul.mubr.f32.gmra.mrb[0].mxu0 %v636
        %v839 = vpop.f32.mrb[0].mxu0
        %v840 = vadd.f32 %v570, %v839
        %v841 = vpop.f32.mrb[0].mxu0
        %842 = vmatprep.mubr.f32.mxu0 0.0
        %843 = vmatmul.mubr.f32.gmra.mrb[0].mxu0 %v639
        %v844 = vpop.f32.mrb[0].mxu0
        %v845 = vadd.f32 %v570, %v844
        %v846 = vpop.f32.mrb[0].mxu0
        %847 = vmatprep.mubr.f32.mxu0 0.0
        %848 = vmatmul.mubr.f32.gmra.mrb[0].mxu0 %v642
        %v849 = vpop.f32.mrb[0].mxu0
        %v850 = vadd.f32 %v570, %v849
        %v851 = vpop.f32.mrb[0].mxu0
        %852 = vmatprep.mubr.f32.mxu0 0.0
        %853 = vmatmul.mubr.f32.gmra.mrb[0].mxu0 %v645
        %v854 = vpop.f32.mrb[0].mxu0
        %v855 = vadd.f32 %v570, %v854
        %v856 = vpop.f32.mrb[0].mxu0
        %857 = vmatprep.mubr.f32.mxu0 0.0
        %858 = vmatmul.mubr.f32.gmra.mrb[0].mxu0 %v648
        %v859 = vpop.f32.mrb[0].mxu0
        %v860 = vadd.f32 %v570, %v859
        %v861 = vpop.f32.mrb[0].mxu0
        %862 = vmatprep.mubr.f32.mxu0 0.0
        %863 = vmatmul.mubr.f32.gmra.mrb[0].mxu0 %v651
        %v864 = vpop.f32.mrb[0].mxu0
        %v865 = vadd.f32 %v570, %v864
        %v866 = vpop.f32.mrb[0].mxu0
        %867 = vmatprep.mubr.f32.mxu0 0.0
        %868 = vmatmul.mubr.f32.gmra.mrb[0].mxu0 %v654
        %v869 = vpop.f32.mrb[0].mxu0
        %v870 = vadd.f32 %v570, %v869
        %v871 = vpop.f32.mrb[0].mxu0
        %872 = vmatprep.mubr.f32.mxu0 0.0
        %873 = vmatmul.mubr.f32.gmra.mrb[0].mxu0 %v657
        %v874 = vpop.f32.mrb[0].mxu0
        %v875 = vadd.f32 %v570, %v874
        %v876 = vpop.f32.mrb[0].mxu0
        %877 = vmatprep.mubr.f32.mxu0 0.0
        %878 = vmatmul.mubr.f32.gmra.mrb[0].mxu0 %v660
        %v879 = vpop.f32.mrb[0].mxu0
        %v880 = vadd.f32 %v570, %v879
        %v881 = vpop.f32.mrb[0].mxu0
        %882 = vmatprep.mubr.f32.mxu0 0.0
        %883 = vmatmul.mubr.f32.gmra.mrb[0].mxu0 %v663
        %v884 = vpop.f32.mrb[0].mxu0
        %v885 = vadd.f32 %v570, %v884
        %v886 = vpop.f32.mrb[0].mxu0
        %887 = vmatprep.mubr.f32.mxu0 0.0
        %888 = vmatmul.mubr.f32.gmra.mrb[0].mxu0 %v666
        %v889 = vpop.f32.mrb[0].mxu0
        %v890 = vadd.f32 %v570, %v889
        %v891 = vpop.f32.mrb[0].mxu0
        %892 = vdwg.mxu0
        %v893 = vmax.f32 %v735, 0.0
        %v894 = vmax.f32 %v740, 0.0
        %v895 = vmax.f32 %v745, 0.0
        %v896 = vmax.f32 %v750, 0.0
        %v897 = vmax.f32 %v755, 0.0
        %v898 = vmax.f32 %v760, 0.0
        %v899 = vmax.f32 %v765, 0.0
        %v900 = vmax.f32 %v770, 0.0
        %v901 = vmax.f32 %v775, 0.0
        %v902 = vmax.f32 %v780, 0.0
        %v903 = vmax.f32 %v785, 0.0
        %v904 = vmax.f32 %v790, 0.0
        %v905 = vmax.f32 %v795, 0.0
        %v906 = vmax.f32 %v800, 0.0
        %v907 = vmax.f32 %v805, 0.0
        %v908 = vmax.f32 %v810, 0.0
        %v909 = vmax.f32 %v815, 0.0
        %v910 = vmax.f32 %v820, 0.0
        %v911 = vmax.f32 %v825, 0.0
        %v912 = vmax.f32 %v830, 0.0
        %v913 = vmax.f32 %v835, 0.0
        %v914 = vmax.f32 %v840, 0.0
        %v915 = vmax.f32 %v845, 0.0
        %v916 = vmax.f32 %v850, 0.0
        %v917 = vmax.f32 %v855, 0.0
        %v918 = vmax.f32 %v860, 0.0
        %v919 = vmax.f32 %v865, 0.0
        %v920 = vmax.f32 %v870, 0.0
        %v921 = vmax.f32 %v875, 0.0
        %v922 = vmax.f32 %v880, 0.0
        %v923 = vmax.f32 %v885, 0.0
        %v924 = vmax.f32 %v890, 0.0
        %v925 = vld [vmem:[%s1 + $0x18] sm:$0xff]
        %v926 = vld [vmem:[%s1 + $0x20] sm:$0xff]
        %v927 = vld [vmem:[%s2 + $0x2] sm:$0x1]
        %v928 = vlaneseq
        %v929 = vshrl.u32 %v928, 7
        %v930 = vsub.s32 0, %v929
        %v931 = vrot.slane %v927, %v930
        %v933 = vsel %vm571, %v893, 0
        %v936 = vsel %vm571, %v894, 0
        %v939 = vsel %vm571, %v895, 0
        %v942 = vsel %vm571, %v896, 0
        %v945 = vsel %vm571, %v897, 0
        %v948 = vsel %vm571, %v898, 0
        %v951 = vsel %vm571, %v899, 0
        %v954 = vsel %vm571, %v900, 0
        %v957 = vsel %vm571, %v901, 0
        %v960 = vsel %vm571, %v902, 0
        %v963 = vsel %vm571, %v903, 0
        %v966 = vsel %vm571, %v904, 0
        %v969 = vsel %vm571, %v905, 0
        %v972 = vsel %vm571, %v906, 0
        %v975 = vsel %vm571, %v907, 0
        %v978 = vsel %vm571, %v908, 0
        %v981 = vsel %vm571, %v909, 0
        %v984 = vsel %vm571, %v910, 0
        %v987 = vsel %vm571, %v911, 0
        %v990 = vsel %vm571, %v912, 0
        %v993 = vsel %vm571, %v913, 0
        %v996 = vsel %vm571, %v914, 0
        %v999 = vsel %vm571, %v915, 0
        %v1002 = vsel %vm571, %v916, 0
        %v1005 = vsel %vm571, %v917, 0
        %v1008 = vsel %vm571, %v918, 0
        %v1011 = vsel %vm571, %v919, 0
        %v1014 = vsel %vm571, %v920, 0
        %v1017 = vsel %vm571, %v921, 0
        %v1020 = vsel %vm571, %v922, 0
        %v1023 = vsel %vm571, %v923, 0
        %v1026 = vsel %vm571, %v924, 0
        %1028 = vmatprep.subr.mxu0 0.0
        %1029 = vmatpush1.msra.mxu0 %v925
        %1030 = vmatprep.subr.mxu0 0.0
        %1031 = vmatpush1.msra.mxu0 %v926
        %1032 = vmatprep.subr.mxu0 0.0
        %1033 = vmatpush1.msra.mxu0 0.0
        %1034 = vmatprep.subr.mxu0 0.0
        %1035 = vmatpush1.msra.mxu0 0.0
        %1036 = vmatprep.subr.mxu0 0.0
        %1037 = vmatpush1.msra.mxu0 0.0
        %1038 = vmatprep.subr.mxu0 0.0
        %1039 = vmatpush1.msra.mxu0 0.0
        %1040 = vmatprep.subr.mxu0 0.0
        %1041 = vmatpush1.msra.mxu0 0.0
        %1042 = vmatprep.subr.mxu0 0.0
        %1043 = vmatpush1.msra.mxu0 0.0
        %1044 = vmatprep.subr.mxu0 0.0
        %1045 = vmatpush1.msra.mxu0 0.0
        %1046 = vmatprep.subr.mxu0 0.0
        %1047 = vmatpush1.msra.mxu0 0.0
        %1048 = vmatprep.subr.mxu0 0.0
        %1049 = vmatpush1.msra.mxu0 0.0
        %1050 = vmatprep.subr.mxu0 0.0
        %1051 = vmatpush1.msra.mxu0 0.0
        %1052 = vmatprep.subr.mxu0 0.0
        %1053 = vmatpush1.msra.mxu0 0.0
        %1054 = vmatprep.subr.mxu0 0.0
        %1055 = vmatpush1.msra.mxu0 0.0
        %1056 = vmatprep.subr.mxu0 0.0
        %1057 = vmatpush1.msra.mxu0 0.0
        %1058 = vmatprep.subr.mxu0 0.0
        %1059 = vmatpush1.msra.mxu0 0.0
        %1060 = vmatprep.subr.mxu0 0.0
        %1061 = vmatpush1.msra.mxu0 0.0
        %1062 = vmatprep.subr.mxu0 0.0
        %1063 = vmatpush1.msra.mxu0 0.0
        %1064 = vmatprep.subr.mxu0 0.0
        %1065 = vmatpush1.msra.mxu0 0.0
        %1066 = vmatprep.subr.mxu0 0.0
        %1067 = vmatpush1.msra.mxu0 0.0
        %1068 = vmatprep.subr.mxu0 0.0
        %1069 = vmatpush1.msra.mxu0 0.0
        %1070 = vmatprep.subr.mxu0 0.0
        %1071 = vmatpush1.msra.mxu0 0.0
        %1072 = vmatprep.subr.mxu0 0.0
        %1073 = vmatpush1.msra.mxu0 0.0
        %1074 = vmatprep.subr.mxu0 0.0
        %1075 = vmatpush1.msra.mxu0 0.0
        %1076 = vmatprep.subr.mxu0 0.0
        %1077 = vmatpush1.msra.mxu0 0.0
        %1078 = vmatprep.subr.mxu0 0.0
        %1079 = vmatpush1.msra.mxu0 0.0
        %1080 = vmatprep.subr.mxu0 0.0
        %1081 = vmatpush1.msra.mxu0 0.0
        %1082 = vmatprep.subr.mxu0 0.0
        %1083 = vmatpush1.msra.mxu0 0.0
        %1084 = vmatprep.subr.mxu0 0.0
        %1085 = vmatpush1.msra.mxu0 0.0
        %1086 = vmatprep.subr.mxu0 0.0
        %1087 = vmatpush1.msra.mxu0 0.0
        %1088 = vmatprep.subr.mxu0 0.0
        %1089 = vmatpush1.msra.mxu0 0.0
        %1090 = vmatprep.subr.mxu0 0.0
        %1091 = vmatpush1.msra.mxu0 0.0
        %1092 = vmatprep.mubr.f32.mxu0 0.0
        %1093 = vmatmul.mubr.f32.gmra.mrb[0].mxu0 %v933
        %v1094 = vpop.f32.mrb[0].mxu0
        %v1095 = vadd.f32 %v931, %v1094
        %v1096 = vpop.f32.mrb[0].mxu0
        %1097 = vmatprep.mubr.f32.mxu0 0.0
        %1098 = vmatmul.mubr.f32.gmra.mrb[0].mxu0 %v936
        %v1099 = vpop.f32.mrb[0].mxu0
        %v1100 = vadd.f32 %v931, %v1099
        %v1101 = vpop.f32.mrb[0].mxu0
        %1102 = vmatprep.mubr.f32.mxu0 0.0
        %1103 = vmatmul.mubr.f32.gmra.mrb[0].mxu0 %v939
        %v1104 = vpop.f32.mrb[0].mxu0
        %v1105 = vadd.f32 %v931, %v1104
        %v1106 = vpop.f32.mrb[0].mxu0
        %1107 = vmatprep.mubr.f32.mxu0 0.0
        %1108 = vmatmul.mubr.f32.gmra.mrb[0].mxu0 %v942
        %v1109 = vpop.f32.mrb[0].mxu0
        %v1110 = vadd.f32 %v931, %v1109
        %v1111 = vpop.f32.mrb[0].mxu0
        %1112 = vmatprep.mubr.f32.mxu0 0.0
        %1113 = vmatmul.mubr.f32.gmra.mrb[0].mxu0 %v945
        %v1114 = vpop.f32.mrb[0].mxu0
        %v1115 = vadd.f32 %v931, %v1114
        %v1116 = vpop.f32.mrb[0].mxu0
        %1117 = vmatprep.mubr.f32.mxu0 0.0
        %1118 = vmatmul.mubr.f32.gmra.mrb[0].mxu0 %v948
        %v1119 = vpop.f32.mrb[0].mxu0
        %v1120 = vadd.f32 %v931, %v1119
        %v1121 = vpop.f32.mrb[0].mxu0
        %1122 = vmatprep.mubr.f32.mxu0 0.0
        %1123 = vmatmul.mubr.f32.gmra.mrb[0].mxu0 %v951
        %v1124 = vpop.f32.mrb[0].mxu0
        %v1125 = vadd.f32 %v931, %v1124
        %v1126 = vpop.f32.mrb[0].mxu0
        %1127 = vmatprep.mubr.f32.mxu0 0.0
        %1128 = vmatmul.mubr.f32.gmra.mrb[0].mxu0 %v954
        %v1129 = vpop.f32.mrb[0].mxu0
        %v1130 = vadd.f32 %v931, %v1129
        %v1131 = vpop.f32.mrb[0].mxu0
        %1132 = vmatprep.mubr.f32.mxu0 0.0
        %1133 = vmatmul.mubr.f32.gmra.mrb[0].mxu0 %v957
        %v1134 = vpop.f32.mrb[0].mxu0
        %v1135 = vadd.f32 %v931, %v1134
        %v1136 = vpop.f32.mrb[0].mxu0
        %1137 = vmatprep.mubr.f32.mxu0 0.0
        %1138 = vmatmul.mubr.f32.gmra.mrb[0].mxu0 %v960
        %v1139 = vpop.f32.mrb[0].mxu0
        %v1140 = vadd.f32 %v931, %v1139
        %v1141 = vpop.f32.mrb[0].mxu0
        %1142 = vmatprep.mubr.f32.mxu0 0.0
        %1143 = vmatmul.mubr.f32.gmra.mrb[0].mxu0 %v963
        %v1144 = vpop.f32.mrb[0].mxu0
        %v1145 = vadd.f32 %v931, %v1144
        %v1146 = vpop.f32.mrb[0].mxu0
        %1147 = vmatprep.mubr.f32.mxu0 0.0
        %1148 = vmatmul.mubr.f32.gmra.mrb[0].mxu0 %v966
        %v1149 = vpop.f32.mrb[0].mxu0
        %v1150 = vadd.f32 %v931, %v1149
        %v1151 = vpop.f32.mrb[0].mxu0
        %1152 = vmatprep.mubr.f32.mxu0 0.0
        %1153 = vmatmul.mubr.f32.gmra.mrb[0].mxu0 %v969
        %v1154 = vpop.f32.mrb[0].mxu0
        %v1155 = vadd.f32 %v931, %v1154
        %v1156 = vpop.f32.mrb[0].mxu0
        %1157 = vmatprep.mubr.f32.mxu0 0.0
        %1158 = vmatmul.mubr.f32.gmra.mrb[0].mxu0 %v972
        %v1159 = vpop.f32.mrb[0].mxu0
        %v1160 = vadd.f32 %v931, %v1159
        %v1161 = vpop.f32.mrb[0].mxu0
        %1162 = vmatprep.mubr.f32.mxu0 0.0
        %1163 = vmatmul.mubr.f32.gmra.mrb[0].mxu0 %v975
        %v1164 = vpop.f32.mrb[0].mxu0
        %v1165 = vadd.f32 %v931, %v1164
        %v1166 = vpop.f32.mrb[0].mxu0
        %1167 = vmatprep.mubr.f32.mxu0 0.0
        %1168 = vmatmul.mubr.f32.gmra.mrb[0].mxu0 %v978
        %v1169 = vpop.f32.mrb[0].mxu0
        %v1170 = vadd.f32 %v931, %v1169
        %v1171 = vpop.f32.mrb[0].mxu0
        %1172 = vmatprep.mubr.f32.mxu0 0.0
        %1173 = vmatmul.mubr.f32.gmra.mrb[0].mxu0 %v981
        %v1174 = vpop.f32.mrb[0].mxu0
        %v1175 = vadd.f32 %v931, %v1174
        %v1176 = vpop.f32.mrb[0].mxu0
        %1177 = vmatprep.mubr.f32.mxu0 0.0
        %1178 = vmatmul.mubr.f32.gmra.mrb[0].mxu0 %v984
        %v1179 = vpop.f32.mrb[0].mxu0
        %v1180 = vadd.f32 %v931, %v1179
        %v1181 = vpop.f32.mrb[0].mxu0
        %1182 = vmatprep.mubr.f32.mxu0 0.0
        %1183 = vmatmul.mubr.f32.gmra.mrb[0].mxu0 %v987
        %v1184 = vpop.f32.mrb[0].mxu0
        %v1185 = vadd.f32 %v931, %v1184
        %v1186 = vpop.f32.mrb[0].mxu0
        %1187 = vmatprep.mubr.f32.mxu0 0.0
        %1188 = vmatmul.mubr.f32.gmra.mrb[0].mxu0 %v990
        %v1189 = vpop.f32.mrb[0].mxu0
        %v1190 = vadd.f32 %v931, %v1189
        %v1191 = vpop.f32.mrb[0].mxu0
        %1192 = vmatprep.mubr.f32.mxu0 0.0
        %1193 = vmatmul.mubr.f32.gmra.mrb[0].mxu0 %v993
        %v1194 = vpop.f32.mrb[0].mxu0
        %v1195 = vadd.f32 %v931, %v1194
        %v1196 = vpop.f32.mrb[0].mxu0
        %1197 = vmatprep.mubr.f32.mxu0 0.0
        %1198 = vmatmul.mubr.f32.gmra.mrb[0].mxu0 %v996
        %v1199 = vpop.f32.mrb[0].mxu0
        %v1200 = vadd.f32 %v931, %v1199
        %v1201 = vpop.f32.mrb[0].mxu0
        %1202 = vmatprep.mubr.f32.mxu0 0.0
        %1203 = vmatmul.mubr.f32.gmra.mrb[0].mxu0 %v999
        %v1204 = vpop.f32.mrb[0].mxu0
        %v1205 = vadd.f32 %v931, %v1204
        %v1206 = vpop.f32.mrb[0].mxu0
        %1207 = vmatprep.mubr.f32.mxu0 0.0
        %1208 = vmatmul.mubr.f32.gmra.mrb[0].mxu0 %v1002
        %v1209 = vpop.f32.mrb[0].mxu0
        %v1210 = vadd.f32 %v931, %v1209
        %v1211 = vpop.f32.mrb[0].mxu0
        %1212 = vmatprep.mubr.f32.mxu0 0.0
        %1213 = vmatmul.mubr.f32.gmra.mrb[0].mxu0 %v1005
        %v1214 = vpop.f32.mrb[0].mxu0
        %v1215 = vadd.f32 %v931, %v1214
        %v1216 = vpop.f32.mrb[0].mxu0
        %1217 = vmatprep.mubr.f32.mxu0 0.0
        %1218 = vmatmul.mubr.f32.gmra.mrb[0].mxu0 %v1008
        %v1219 = vpop.f32.mrb[0].mxu0
        %v1220 = vadd.f32 %v931, %v1219
        %v1221 = vpop.f32.mrb[0].mxu0
        %1222 = vmatprep.mubr.f32.mxu0 0.0
        %1223 = vmatmul.mubr.f32.gmra.mrb[0].mxu0 %v1011
        %v1224 = vpop.f32.mrb[0].mxu0
        %v1225 = vadd.f32 %v931, %v1224
        %v1226 = vpop.f32.mrb[0].mxu0
        %1227 = vmatprep.mubr.f32.mxu0 0.0
        %1228 = vmatmul.mubr.f32.gmra.mrb[0].mxu0 %v1014
        %v1229 = vpop.f32.mrb[0].mxu0
        %v1230 = vadd.f32 %v931, %v1229
        %v1231 = vpop.f32.mrb[0].mxu0
        %1232 = vmatprep.mubr.f32.mxu0 0.0
        %1233 = vmatmul.mubr.f32.gmra.mrb[0].mxu0 %v1017
        %v1234 = vpop.f32.mrb[0].mxu0
        %v1235 = vadd.f32 %v931, %v1234
        %v1236 = vpop.f32.mrb[0].mxu0
        %1237 = vmatprep.mubr.f32.mxu0 0.0
        %1238 = vmatmul.mubr.f32.gmra.mrb[0].mxu0 %v1020
        %v1239 = vpop.f32.mrb[0].mxu0
        %v1240 = vadd.f32 %v931, %v1239
        %v1241 = vpop.f32.mrb[0].mxu0
        %1242 = vmatprep.mubr.f32.mxu0 0.0
        %1243 = vmatmul.mubr.f32.gmra.mrb[0].mxu0 %v1023
        %v1244 = vpop.f32.mrb[0].mxu0
        %v1245 = vadd.f32 %v931, %v1244
        %v1246 = vpop.f32.mrb[0].mxu0
        %1247 = vmatprep.mubr.f32.mxu0 0.0
        %1248 = vmatmul.mubr.f32.gmra.mrb[0].mxu0 %v1026
        %v1249 = vpop.f32.mrb[0].mxu0
        %v1250 = vadd.f32 %v931, %v1249
        %v1251 = vpop.f32.mrb[0].mxu0
        %1252 = vdwg.mxu0
        %v1253 = vmax.f32 %v1095, 0.0
        %v1254 = vmax.f32 %v1100, 0.0
        %v1255 = vmax.f32 %v1105, 0.0
        %v1256 = vmax.f32 %v1110, 0.0
        %v1257 = vmax.f32 %v1115, 0.0
        %v1258 = vmax.f32 %v1120, 0.0
        %v1259 = vmax.f32 %v1125, 0.0
        %v1260 = vmax.f32 %v1130, 0.0
        %v1261 = vmax.f32 %v1135, 0.0
        %v1262 = vmax.f32 %v1140, 0.0
        %v1263 = vmax.f32 %v1145, 0.0
        %v1264 = vmax.f32 %v1150, 0.0
        %v1265 = vmax.f32 %v1155, 0.0
        %v1266 = vmax.f32 %v1160, 0.0
        %v1267 = vmax.f32 %v1165, 0.0
        %v1268 = vmax.f32 %v1170, 0.0
        %v1269 = vmax.f32 %v1175, 0.0
        %v1270 = vmax.f32 %v1180, 0.0
        %v1271 = vmax.f32 %v1185, 0.0
        %v1272 = vmax.f32 %v1190, 0.0
        %v1273 = vmax.f32 %v1195, 0.0
        %v1274 = vmax.f32 %v1200, 0.0
        %v1275 = vmax.f32 %v1205, 0.0
        %v1276 = vmax.f32 %v1210, 0.0
        %v1277 = vmax.f32 %v1215, 0.0
        %v1278 = vmax.f32 %v1220, 0.0
        %v1279 = vmax.f32 %v1225, 0.0
        %v1280 = vmax.f32 %v1230, 0.0
        %v1281 = vmax.f32 %v1235, 0.0
        %v1282 = vmax.f32 %v1240, 0.0
        %v1283 = vmax.f32 %v1245, 0.0
        %v1284 = vmax.f32 %v1250, 0.0
        %v1285 = vld [vmem:[%s1 + $0x28] sm:$0xff]
        %v1286 = vld [vmem:[%s1 + $0x30] sm:$0xff]
        %v1287 = vld [vmem:[%s2 + $0x3] sm:$0x1]
        %v1288 = vlaneseq
        %v1289 = vshrl.u32 %v1288, 7
        %v1290 = vsub.s32 0, %v1289
        %v1291 = vrot.slane %v1287, %v1290
        %v1293 = vsel %vm571, %v1253, 0
        %v1296 = vsel %vm571, %v1254, 0
        %v1299 = vsel %vm571, %v1255, 0
        %v1302 = vsel %vm571, %v1256, 0
        %v1305 = vsel %vm571, %v1257, 0
        %v1308 = vsel %vm571, %v1258, 0
        %v1311 = vsel %vm571, %v1259, 0
        %v1314 = vsel %vm571, %v1260, 0
        %v1317 = vsel %vm571, %v1261, 0
        %v1320 = vsel %vm571, %v1262, 0
        %v1323 = vsel %vm571, %v1263, 0
        %v1326 = vsel %vm571, %v1264, 0
        %v1329 = vsel %vm571, %v1265, 0
        %v1332 = vsel %vm571, %v1266, 0
        %v1335 = vsel %vm571, %v1267, 0
        %v1338 = vsel %vm571, %v1268, 0
        %v1341 = vsel %vm571, %v1269, 0
        %v1344 = vsel %vm571, %v1270, 0
        %v1347 = vsel %vm571, %v1271, 0
        %v1350 = vsel %vm571, %v1272, 0
        %v1353 = vsel %vm571, %v1273, 0
        %v1356 = vsel %vm571, %v1274, 0
        %v1359 = vsel %vm571, %v1275, 0
        %v1362 = vsel %vm571, %v1276, 0
        %v1365 = vsel %vm571, %v1277, 0
        %v1368 = vsel %vm571, %v1278, 0
        %v1371 = vsel %vm571, %v1279, 0
        %v1374 = vsel %vm571, %v1280, 0
        %v1377 = vsel %vm571, %v1281, 0
        %v1380 = vsel %vm571, %v1282, 0
        %v1383 = vsel %vm571, %v1283, 0
        %v1386 = vsel %vm571, %v1284, 0
        %1388 = vmatprep.subr.mxu0 0.0
        %1389 = vmatpush1.msra.mxu0 %v1285
        %1390 = vmatprep.subr.mxu0 0.0
        %1391 = vmatpush1.msra.mxu0 %v1286
        %1392 = vmatprep.subr.mxu0 0.0
        %1393 = vmatpush1.msra.mxu0 0.0
        %1394 = vmatprep.subr.mxu0 0.0
        %1395 = vmatpush1.msra.mxu0 0.0
        %1396 = vmatprep.subr.mxu0 0.0
        %1397 = vmatpush1.msra.mxu0 0.0
        %1398 = vmatprep.subr.mxu0 0.0
        %1399 = vmatpush1.msra.mxu0 0.0
        %1400 = vmatprep.subr.mxu0 0.0
        %1401 = vmatpush1.msra.mxu0 0.0
        %1402 = vmatprep.subr.mxu0 0.0
        %1403 = vmatpush1.msra.mxu0 0.0
        %1404 = vmatprep.subr.mxu0 0.0
        %1405 = vmatpush1.msra.mxu0 0.0
        %1406 = vmatprep.subr.mxu0 0.0
        %1407 = vmatpush1.msra.mxu0 0.0
        %1408 = vmatprep.subr.mxu0 0.0
        %1409 = vmatpush1.msra.mxu0 0.0
        %1410 = vmatprep.subr.mxu0 0.0
        %1411 = vmatpush1.msra.mxu0 0.0
        %1412 = vmatprep.subr.mxu0 0.0
        %1413 = vmatpush1.msra.mxu0 0.0
        %1414 = vmatprep.subr.mxu0 0.0
        %1415 = vmatpush1.msra.mxu0 0.0
        %1416 = vmatprep.subr.mxu0 0.0
        %1417 = vmatpush1.msra.mxu0 0.0
        %1418 = vmatprep.subr.mxu0 0.0
        %1419 = vmatpush1.msra.mxu0 0.0
        %1420 = vmatprep.subr.mxu0 0.0
        %1421 = vmatpush1.msra.mxu0 0.0
        %1422 = vmatprep.subr.mxu0 0.0
        %1423 = vmatpush1.msra.mxu0 0.0
        %1424 = vmatprep.subr.mxu0 0.0
        %1425 = vmatpush1.msra.mxu0 0.0
        %1426 = vmatprep.subr.mxu0 0.0
        %1427 = vmatpush1.msra.mxu0 0.0
        %1428 = vmatprep.subr.mxu0 0.0
        %1429 = vmatpush1.msra.mxu0 0.0
        %1430 = vmatprep.subr.mxu0 0.0
        %1431 = vmatpush1.msra.mxu0 0.0
        %1432 = vmatprep.subr.mxu0 0.0
        %1433 = vmatpush1.msra.mxu0 0.0
        %1434 = vmatprep.subr.mxu0 0.0
        %1435 = vmatpush1.msra.mxu0 0.0
        %1436 = vmatprep.subr.mxu0 0.0
        %1437 = vmatpush1.msra.mxu0 0.0
        %1438 = vmatprep.subr.mxu0 0.0
        %1439 = vmatpush1.msra.mxu0 0.0
        %1440 = vmatprep.subr.mxu0 0.0
        %1441 = vmatpush1.msra.mxu0 0.0
        %1442 = vmatprep.subr.mxu0 0.0
        %1443 = vmatpush1.msra.mxu0 0.0
        %1444 = vmatprep.subr.mxu0 0.0
        %1445 = vmatpush1.msra.mxu0 0.0
        %1446 = vmatprep.subr.mxu0 0.0
        %1447 = vmatpush1.msra.mxu0 0.0
        %1448 = vmatprep.subr.mxu0 0.0
        %1449 = vmatpush1.msra.mxu0 0.0
        %1450 = vmatprep.subr.mxu0 0.0
        %1451 = vmatpush1.msra.mxu0 0.0
        %1452 = vmatprep.mubr.f32.mxu0 0.0
        %1453 = vmatmul.mubr.f32.gmra.mrb[0].mxu0 %v1293
        %v1454 = vpop.f32.mrb[0].mxu0
        %v1455 = vadd.f32 %v1291, %v1454
        %v1456 = vpop.f32.mrb[0].mxu0
        %1457 = vmatprep.mubr.f32.mxu0 0.0
        %1458 = vmatmul.mubr.f32.gmra.mrb[0].mxu0 %v1296
        %v1459 = vpop.f32.mrb[0].mxu0
        %v1460 = vadd.f32 %v1291, %v1459
        %v1461 = vpop.f32.mrb[0].mxu0
        %1462 = vmatprep.mubr.f32.mxu0 0.0
        %1463 = vmatmul.mubr.f32.gmra.mrb[0].mxu0 %v1299
        %v1464 = vpop.f32.mrb[0].mxu0
        %v1465 = vadd.f32 %v1291, %v1464
        %v1466 = vpop.f32.mrb[0].mxu0
        %1467 = vmatprep.mubr.f32.mxu0 0.0
        %1468 = vmatmul.mubr.f32.gmra.mrb[0].mxu0 %v1302
        %v1469 = vpop.f32.mrb[0].mxu0
        %v1470 = vadd.f32 %v1291, %v1469
        %v1471 = vpop.f32.mrb[0].mxu0
        %1472 = vmatprep.mubr.f32.mxu0 0.0
        %1473 = vmatmul.mubr.f32.gmra.mrb[0].mxu0 %v1305
        %v1474 = vpop.f32.mrb[0].mxu0
        %v1475 = vadd.f32 %v1291, %v1474
        %v1476 = vpop.f32.mrb[0].mxu0
        %1477 = vmatprep.mubr.f32.mxu0 0.0
        %1478 = vmatmul.mubr.f32.gmra.mrb[0].mxu0 %v1308
        %v1479 = vpop.f32.mrb[0].mxu0
        %v1480 = vadd.f32 %v1291, %v1479
        %v1481 = vpop.f32.mrb[0].mxu0
        %1482 = vmatprep.mubr.f32.mxu0 0.0
        %1483 = vmatmul.mubr.f32.gmra.mrb[0].mxu0 %v1311
        %v1484 = vpop.f32.mrb[0].mxu0
        %v1485 = vadd.f32 %v1291, %v1484
        %v1486 = vpop.f32.mrb[0].mxu0
        %1487 = vmatprep.mubr.f32.mxu0 0.0
        %1488 = vmatmul.mubr.f32.gmra.mrb[0].mxu0 %v1314
        %v1489 = vpop.f32.mrb[0].mxu0
        %v1490 = vadd.f32 %v1291, %v1489
        %v1491 = vpop.f32.mrb[0].mxu0
        %1492 = vmatprep.mubr.f32.mxu0 0.0
        %1493 = vmatmul.mubr.f32.gmra.mrb[0].mxu0 %v1317
        %v1494 = vpop.f32.mrb[0].mxu0
        %v1495 = vadd.f32 %v1291, %v1494
        %v1496 = vpop.f32.mrb[0].mxu0
        %1497 = vmatprep.mubr.f32.mxu0 0.0
        %1498 = vmatmul.mubr.f32.gmra.mrb[0].mxu0 %v1320
        %v1499 = vpop.f32.mrb[0].mxu0
        %v1500 = vadd.f32 %v1291, %v1499
        %v1501 = vpop.f32.mrb[0].mxu0
        %1502 = vmatprep.mubr.f32.mxu0 0.0
        %1503 = vmatmul.mubr.f32.gmra.mrb[0].mxu0 %v1323
        %v1504 = vpop.f32.mrb[0].mxu0
        %v1505 = vadd.f32 %v1291, %v1504
        %v1506 = vpop.f32.mrb[0].mxu0
        %1507 = vmatprep.mubr.f32.mxu0 0.0
        %1508 = vmatmul.mubr.f32.gmra.mrb[0].mxu0 %v1326
        %v1509 = vpop.f32.mrb[0].mxu0
        %v1510 = vadd.f32 %v1291, %v1509
        %v1511 = vpop.f32.mrb[0].mxu0
        %1512 = vmatprep.mubr.f32.mxu0 0.0
        %1513 = vmatmul.mubr.f32.gmra.mrb[0].mxu0 %v1329
        %v1514 = vpop.f32.mrb[0].mxu0
        %v1515 = vadd.f32 %v1291, %v1514
        %v1516 = vpop.f32.mrb[0].mxu0
        %1517 = vmatprep.mubr.f32.mxu0 0.0
        %1518 = vmatmul.mubr.f32.gmra.mrb[0].mxu0 %v1332
        %v1519 = vpop.f32.mrb[0].mxu0
        %v1520 = vadd.f32 %v1291, %v1519
        %v1521 = vpop.f32.mrb[0].mxu0
        %1522 = vmatprep.mubr.f32.mxu0 0.0
        %1523 = vmatmul.mubr.f32.gmra.mrb[0].mxu0 %v1335
        %v1524 = vpop.f32.mrb[0].mxu0
        %v1525 = vadd.f32 %v1291, %v1524
        %v1526 = vpop.f32.mrb[0].mxu0
        %1527 = vmatprep.mubr.f32.mxu0 0.0
        %1528 = vmatmul.mubr.f32.gmra.mrb[0].mxu0 %v1338
        %v1529 = vpop.f32.mrb[0].mxu0
        %v1530 = vadd.f32 %v1291, %v1529
        %v1531 = vpop.f32.mrb[0].mxu0
        %1532 = vmatprep.mubr.f32.mxu0 0.0
        %1533 = vmatmul.mubr.f32.gmra.mrb[0].mxu0 %v1341
        %v1534 = vpop.f32.mrb[0].mxu0
        %v1535 = vadd.f32 %v1291, %v1534
        %v1536 = vpop.f32.mrb[0].mxu0
        %1537 = vmatprep.mubr.f32.mxu0 0.0
        %1538 = vmatmul.mubr.f32.gmra.mrb[0].mxu0 %v1344
        %v1539 = vpop.f32.mrb[0].mxu0
        %v1540 = vadd.f32 %v1291, %v1539
        %v1541 = vpop.f32.mrb[0].mxu0
        %1542 = vmatprep.mubr.f32.mxu0 0.0
        %1543 = vmatmul.mubr.f32.gmra.mrb[0].mxu0 %v1347
        %v1544 = vpop.f32.mrb[0].mxu0
        %v1545 = vadd.f32 %v1291, %v1544
        %v1546 = vpop.f32.mrb[0].mxu0
        %1547 = vmatprep.mubr.f32.mxu0 0.0
        %1548 = vmatmul.mubr.f32.gmra.mrb[0].mxu0 %v1350
        %v1549 = vpop.f32.mrb[0].mxu0
        %v1550 = vadd.f32 %v1291, %v1549
        %v1551 = vpop.f32.mrb[0].mxu0
        %1552 = vmatprep.mubr.f32.mxu0 0.0
        %1553 = vmatmul.mubr.f32.gmra.mrb[0].mxu0 %v1353
        %v1554 = vpop.f32.mrb[0].mxu0
        %v1555 = vadd.f32 %v1291, %v1554
        %v1556 = vpop.f32.mrb[0].mxu0
        %1557 = vmatprep.mubr.f32.mxu0 0.0
        %1558 = vmatmul.mubr.f32.gmra.mrb[0].mxu0 %v1356
        %v1559 = vpop.f32.mrb[0].mxu0
        %v1560 = vadd.f32 %v1291, %v1559
        %v1561 = vpop.f32.mrb[0].mxu0
        %1562 = vmatprep.mubr.f32.mxu0 0.0
        %1563 = vmatmul.mubr.f32.gmra.mrb[0].mxu0 %v1359
        %v1564 = vpop.f32.mrb[0].mxu0
        %v1565 = vadd.f32 %v1291, %v1564
        %v1566 = vpop.f32.mrb[0].mxu0
        %1567 = vmatprep.mubr.f32.mxu0 0.0
        %1568 = vmatmul.mubr.f32.gmra.mrb[0].mxu0 %v1362
        %v1569 = vpop.f32.mrb[0].mxu0
        %v1570 = vadd.f32 %v1291, %v1569
        %v1571 = vpop.f32.mrb[0].mxu0
        %1572 = vmatprep.mubr.f32.mxu0 0.0
        %1573 = vmatmul.mubr.f32.gmra.mrb[0].mxu0 %v1365
        %v1574 = vpop.f32.mrb[0].mxu0
        %v1575 = vadd.f32 %v1291, %v1574
        %v1576 = vpop.f32.mrb[0].mxu0
        %1577 = vmatprep.mubr.f32.mxu0 0.0
        %1578 = vmatmul.mubr.f32.gmra.mrb[0].mxu0 %v1368
        %v1579 = vpop.f32.mrb[0].mxu0
        %v1580 = vadd.f32 %v1291, %v1579
        %v1581 = vpop.f32.mrb[0].mxu0
        %1582 = vmatprep.mubr.f32.mxu0 0.0
        %1583 = vmatmul.mubr.f32.gmra.mrb[0].mxu0 %v1371
        %v1584 = vpop.f32.mrb[0].mxu0
        %v1585 = vadd.f32 %v1291, %v1584
        %v1586 = vpop.f32.mrb[0].mxu0
        %1587 = vmatprep.mubr.f32.mxu0 0.0
        %1588 = vmatmul.mubr.f32.gmra.mrb[0].mxu0 %v1374
        %v1589 = vpop.f32.mrb[0].mxu0
        %v1590 = vadd.f32 %v1291, %v1589
        %v1591 = vpop.f32.mrb[0].mxu0
        %1592 = vmatprep.mubr.f32.mxu0 0.0
        %1593 = vmatmul.mubr.f32.gmra.mrb[0].mxu0 %v1377
        %v1594 = vpop.f32.mrb[0].mxu0
        %v1595 = vadd.f32 %v1291, %v1594
        %v1596 = vpop.f32.mrb[0].mxu0
        %1597 = vmatprep.mubr.f32.mxu0 0.0
        %1598 = vmatmul.mubr.f32.gmra.mrb[0].mxu0 %v1380
        %v1599 = vpop.f32.mrb[0].mxu0
        %v1600 = vadd.f32 %v1291, %v1599
        %v1601 = vpop.f32.mrb[0].mxu0
        %1602 = vmatprep.mubr.f32.mxu0 0.0
        %1603 = vmatmul.mubr.f32.gmra.mrb[0].mxu0 %v1383
        %v1604 = vpop.f32.mrb[0].mxu0
        %v1605 = vadd.f32 %v1291, %v1604
        %v1606 = vpop.f32.mrb[0].mxu0
        %1607 = vmatprep.mubr.f32.mxu0 0.0
        %1608 = vmatmul.mubr.f32.gmra.mrb[0].mxu0 %v1386
        %v1609 = vpop.f32.mrb[0].mxu0
        %v1610 = vadd.f32 %v1291, %v1609
        %v1611 = vpop.f32.mrb[0].mxu0
        %1612 = vdwg.mxu0
        %v1613 = vrot.slane %v1455, 4
        %v1614 = vmax.f32 %v1455, %v1613
        %v1615 = vrot.slane %v1614, 2
        %v1616 = vmax.f32 %v1614, %v1615
        %v1617 = vrot.slane %v1616, 1
        %v1618 = vmax.f32 %v1616, %v1617
        %v1619 = vrot.slane %v1460, 4
        %v1620 = vmax.f32 %v1460, %v1619
        %v1621 = vrot.slane %v1620, 2
        %v1622 = vmax.f32 %v1620, %v1621
        %v1623 = vrot.slane %v1622, 1
        %v1624 = vmax.f32 %v1622, %v1623
        %v1625 = vrot.slane %v1465, 4
        %v1626 = vmax.f32 %v1465, %v1625
        %v1627 = vrot.slane %v1626, 2
        %v1628 = vmax.f32 %v1626, %v1627
        %v1629 = vrot.slane %v1628, 1
        %v1630 = vmax.f32 %v1628, %v1629
        %v1631 = vrot.slane %v1470, 4
        %v1632 = vmax.f32 %v1470, %v1631
        %v1633 = vrot.slane %v1632, 2
        %v1634 = vmax.f32 %v1632, %v1633
        %v1635 = vrot.slane %v1634, 1
        %v1636 = vmax.f32 %v1634, %v1635
        %v1637 = vrot.slane %v1475, 4
        %v1638 = vmax.f32 %v1475, %v1637
        %v1639 = vrot.slane %v1638, 2
        %v1640 = vmax.f32 %v1638, %v1639
        %v1641 = vrot.slane %v1640, 1
        %v1642 = vmax.f32 %v1640, %v1641
        %v1643 = vrot.slane %v1480, 4
        %v1644 = vmax.f32 %v1480, %v1643
        %v1645 = vrot.slane %v1644, 2
        %v1646 = vmax.f32 %v1644, %v1645
        %v1647 = vrot.slane %v1646, 1
        %v1648 = vmax.f32 %v1646, %v1647
        %v1649 = vrot.slane %v1485, 4
        %v1650 = vmax.f32 %v1485, %v1649
        %v1651 = vrot.slane %v1650, 2
        %v1652 = vmax.f32 %v1650, %v1651
        %v1653 = vrot.slane %v1652, 1
        %v1654 = vmax.f32 %v1652, %v1653
        %v1655 = vrot.slane %v1490, 4
        %v1656 = vmax.f32 %v1490, %v1655
        %v1657 = vrot.slane %v1656, 2
        %v1658 = vmax.f32 %v1656, %v1657
        %v1659 = vrot.slane %v1658, 1
        %v1660 = vmax.f32 %v1658, %v1659
        %v1661 = vrot.slane %v1495, 4
        %v1662 = vmax.f32 %v1495, %v1661
        %v1663 = vrot.slane %v1662, 2
        %v1664 = vmax.f32 %v1662, %v1663
        %v1665 = vrot.slane %v1664, 1
        %v1666 = vmax.f32 %v1664, %v1665
        %v1667 = vrot.slane %v1500, 4
        %v1668 = vmax.f32 %v1500, %v1667
        %v1669 = vrot.slane %v1668, 2
        %v1670 = vmax.f32 %v1668, %v1669
        %v1671 = vrot.slane %v1670, 1
        %v1672 = vmax.f32 %v1670, %v1671
        %v1673 = vrot.slane %v1505, 4
        %v1674 = vmax.f32 %v1505, %v1673
        %v1675 = vrot.slane %v1674, 2
        %v1676 = vmax.f32 %v1674, %v1675
        %v1677 = vrot.slane %v1676, 1
        %v1678 = vmax.f32 %v1676, %v1677
        %v1679 = vrot.slane %v1510, 4
        %v1680 = vmax.f32 %v1510, %v1679
        %v1681 = vrot.slane %v1680, 2
        %v1682 = vmax.f32 %v1680, %v1681
        %v1683 = vrot.slane %v1682, 1
        %v1684 = vmax.f32 %v1682, %v1683
        %v1685 = vrot.slane %v1515, 4
        %v1686 = vmax.f32 %v1515, %v1685
        %v1687 = vrot.slane %v1686, 2
        %v1688 = vmax.f32 %v1686, %v1687
        %v1689 = vrot.slane %v1688, 1
        %v1690 = vmax.f32 %v1688, %v1689
        %v1691 = vrot.slane %v1520, 4
        %v1692 = vmax.f32 %v1520, %v1691
        %v1693 = vrot.slane %v1692, 2
        %v1694 = vmax.f32 %v1692, %v1693
        %v1695 = vrot.slane %v1694, 1
        %v1696 = vmax.f32 %v1694, %v1695
        %v1697 = vrot.slane %v1525, 4
        %v1698 = vmax.f32 %v1525, %v1697
        %v1699 = vrot.slane %v1698, 2
        %v1700 = vmax.f32 %v1698, %v1699
        %v1701 = vrot.slane %v1700, 1
        %v1702 = vmax.f32 %v1700, %v1701
        %v1703 = vrot.slane %v1530, 4
        %v1704 = vmax.f32 %v1530, %v1703
        %v1705 = vrot.slane %v1704, 2
        %v1706 = vmax.f32 %v1704, %v1705
        %v1707 = vrot.slane %v1706, 1
        %v1708 = vmax.f32 %v1706, %v1707
        %v1709 = vrot.slane %v1535, 4
        %v1710 = vmax.f32 %v1535, %v1709
        %v1711 = vrot.slane %v1710, 2
        %v1712 = vmax.f32 %v1710, %v1711
        %v1713 = vrot.slane %v1712, 1
        %v1714 = vmax.f32 %v1712, %v1713
        %v1715 = vrot.slane %v1540, 4
        %v1716 = vmax.f32 %v1540, %v1715
        %v1717 = vrot.slane %v1716, 2
        %v1718 = vmax.f32 %v1716, %v1717
        %v1719 = vrot.slane %v1718, 1
        %v1720 = vmax.f32 %v1718, %v1719
        %v1721 = vrot.slane %v1545, 4
        %v1722 = vmax.f32 %v1545, %v1721
        %v1723 = vrot.slane %v1722, 2
        %v1724 = vmax.f32 %v1722, %v1723
        %v1725 = vrot.slane %v1724, 1
        %v1726 = vmax.f32 %v1724, %v1725
        %v1727 = vrot.slane %v1550, 4
        %v1728 = vmax.f32 %v1550, %v1727
        %v1729 = vrot.slane %v1728, 2
        %v1730 = vmax.f32 %v1728, %v1729
        %v1731 = vrot.slane %v1730, 1
        %v1732 = vmax.f32 %v1730, %v1731
        %v1733 = vrot.slane %v1555, 4
        %v1734 = vmax.f32 %v1555, %v1733
        %v1735 = vrot.slane %v1734, 2
        %v1736 = vmax.f32 %v1734, %v1735
        %v1737 = vrot.slane %v1736, 1
        %v1738 = vmax.f32 %v1736, %v1737
        %v1739 = vrot.slane %v1560, 4
        %v1740 = vmax.f32 %v1560, %v1739
        %v1741 = vrot.slane %v1740, 2
        %v1742 = vmax.f32 %v1740, %v1741
        %v1743 = vrot.slane %v1742, 1
        %v1744 = vmax.f32 %v1742, %v1743
        %v1745 = vrot.slane %v1565, 4
        %v1746 = vmax.f32 %v1565, %v1745
        %v1747 = vrot.slane %v1746, 2
        %v1748 = vmax.f32 %v1746, %v1747
        %v1749 = vrot.slane %v1748, 1
        %v1750 = vmax.f32 %v1748, %v1749
        %v1751 = vrot.slane %v1570, 4
        %v1752 = vmax.f32 %v1570, %v1751
        %v1753 = vrot.slane %v1752, 2
        %v1754 = vmax.f32 %v1752, %v1753
        %v1755 = vrot.slane %v1754, 1
        %v1756 = vmax.f32 %v1754, %v1755
        %v1757 = vrot.slane %v1575, 4
        %v1758 = vmax.f32 %v1575, %v1757
        %v1759 = vrot.slane %v1758, 2
        %v1760 = vmax.f32 %v1758, %v1759
        %v1761 = vrot.slane %v1760, 1
        %v1762 = vmax.f32 %v1760, %v1761
        %v1763 = vrot.slane %v1580, 4
        %v1764 = vmax.f32 %v1580, %v1763
        %v1765 = vrot.slane %v1764, 2
        %v1766 = vmax.f32 %v1764, %v1765
        %v1767 = vrot.slane %v1766, 1
        %v1768 = vmax.f32 %v1766, %v1767
        %v1769 = vrot.slane %v1585, 4
        %v1770 = vmax.f32 %v1585, %v1769
        %v1771 = vrot.slane %v1770, 2
        %v1772 = vmax.f32 %v1770, %v1771
        %v1773 = vrot.slane %v1772, 1
        %v1774 = vmax.f32 %v1772, %v1773
        %v1775 = vrot.slane %v1590, 4
        %v1776 = vmax.f32 %v1590, %v1775
        %v1777 = vrot.slane %v1776, 2
        %v1778 = vmax.f32 %v1776, %v1777
        %v1779 = vrot.slane %v1778, 1
        %v1780 = vmax.f32 %v1778, %v1779
        %v1781 = vrot.slane %v1595, 4
        %v1782 = vmax.f32 %v1595, %v1781
        %v1783 = vrot.slane %v1782, 2
        %v1784 = vmax.f32 %v1782, %v1783
        %v1785 = vrot.slane %v1784, 1
        %v1786 = vmax.f32 %v1784, %v1785
        %v1787 = vrot.slane %v1600, 4
        %v1788 = vmax.f32 %v1600, %v1787
        %v1789 = vrot.slane %v1788, 2
        %v1790 = vmax.f32 %v1788, %v1789
        %v1791 = vrot.slane %v1790, 1
        %v1792 = vmax.f32 %v1790, %v1791
        %v1793 = vrot.slane %v1605, 4
        %v1794 = vmax.f32 %v1605, %v1793
        %v1795 = vrot.slane %v1794, 2
        %v1796 = vmax.f32 %v1794, %v1795
        %v1797 = vrot.slane %v1796, 1
        %v1798 = vmax.f32 %v1796, %v1797
        %v1799 = vrot.slane %v1610, 4
        %v1800 = vmax.f32 %v1610, %v1799
        %v1801 = vrot.slane %v1800, 2
        %v1802 = vmax.f32 %v1800, %v1801
        %v1803 = vrot.slane %v1802, 1
        %v1804 = vmax.f32 %v1802, %v1803
        %v1805 = vsub.f32 %v1455, %v1618
        %v1806 = vsub.f32 %v1460, %v1624
        %v1807 = vsub.f32 %v1465, %v1630
        %v1808 = vsub.f32 %v1470, %v1636
        %v1809 = vsub.f32 %v1475, %v1642
        %v1810 = vsub.f32 %v1480, %v1648
        %v1811 = vsub.f32 %v1485, %v1654
        %v1812 = vsub.f32 %v1490, %v1660
        %v1813 = vsub.f32 %v1495, %v1666
        %v1814 = vsub.f32 %v1500, %v1672
        %v1815 = vsub.f32 %v1505, %v1678
        %v1816 = vsub.f32 %v1510, %v1684
        %v1817 = vsub.f32 %v1515, %v1690
        %v1818 = vsub.f32 %v1520, %v1696
        %v1819 = vsub.f32 %v1525, %v1702
        %v1820 = vsub.f32 %v1530, %v1708
        %v1821 = vsub.f32 %v1535, %v1714
        %v1822 = vsub.f32 %v1540, %v1720
        %v1823 = vsub.f32 %v1545, %v1726
        %v1824 = vsub.f32 %v1550, %v1732
        %v1825 = vsub.f32 %v1555, %v1738
        %v1826 = vsub.f32 %v1560, %v1744
        %v1827 = vsub.f32 %v1565, %v1750
        %v1828 = vsub.f32 %v1570, %v1756
        %v1829 = vsub.f32 %v1575, %v1762
        %v1830 = vsub.f32 %v1580, %v1768
        %v1831 = vsub.f32 %v1585, %v1774
        %v1832 = vsub.f32 %v1590, %v1780
        %v1833 = vsub.f32 %v1595, %v1786
        %v1834 = vsub.f32 %v1600, %v1792
        %v1835 = vsub.f32 %v1605, %v1798
        %v1836 = vsub.f32 %v1610, %v1804
        %v1837 = vmul.f32 %v1805, 1.442695
        %v1838 = vpow.pop %v1837
        %v1839 = vmul.f32 %v1806, 1.442695
        %v1840 = vpow.pop %v1839
        %v1841 = vmul.f32 %v1807, 1.442695
        %v1842 = vpow.pop %v1841
        %v1843 = vmul.f32 %v1808, 1.442695
        %v1844 = vpow.pop %v1843
        %v1845 = vmul.f32 %v1809, 1.442695
        %v1846 = vpow.pop %v1845
        %v1847 = vmul.f32 %v1810, 1.442695
        %v1848 = vpow.pop %v1847
        %v1849 = vmul.f32 %v1811, 1.442695
        %v1850 = vpow.pop %v1849
        %v1851 = vmul.f32 %v1812, 1.442695
        %v1852 = vpow.pop %v1851
        %v1853 = vmul.f32 %v1813, 1.442695
        %v1854 = vpow.pop %v1853
        %v1855 = vmul.f32 %v1814, 1.442695
        %v1856 = vpow.pop %v1855
        %v1857 = vmul.f32 %v1815, 1.442695
        %v1858 = vpow.pop %v1857
        %v1859 = vmul.f32 %v1816, 1.442695
        %v1860 = vpow.pop %v1859
        %v1861 = vmul.f32 %v1817, 1.442695
        %v1862 = vpow.pop %v1861
        %v1863 = vmul.f32 %v1818, 1.442695
        %v1864 = vpow.pop %v1863
        %v1865 = vmul.f32 %v1819, 1.442695
        %v1866 = vpow.pop %v1865
        %v1867 = vmul.f32 %v1820, 1.442695
        %v1868 = vpow.pop %v1867
        %v1869 = vmul.f32 %v1821, 1.442695
        %v1870 = vpow.pop %v1869
        %v1871 = vmul.f32 %v1822, 1.442695
        %v1872 = vpow.pop %v1871
        %v1873 = vmul.f32 %v1823, 1.442695
        %v1874 = vpow.pop %v1873
        %v1875 = vmul.f32 %v1824, 1.442695
        %v1876 = vpow.pop %v1875
        %v1877 = vmul.f32 %v1825, 1.442695
        %v1878 = vpow.pop %v1877
        %v1879 = vmul.f32 %v1826, 1.442695
        %v1880 = vpow.pop %v1879
        %v1881 = vmul.f32 %v1827, 1.442695
        %v1882 = vpow.pop %v1881
        %v1883 = vmul.f32 %v1828, 1.442695
        %v1884 = vpow.pop %v1883
        %v1885 = vmul.f32 %v1829, 1.442695
        %v1886 = vpow.pop %v1885
        %v1887 = vmul.f32 %v1830, 1.442695
        %v1888 = vpow.pop %v1887
        %v1889 = vmul.f32 %v1831, 1.442695
        %v1890 = vpow.pop %v1889
        %v1891 = vmul.f32 %v1832, 1.442695
        %v1892 = vpow.pop %v1891
        %v1893 = vmul.f32 %v1833, 1.442695
        %v1894 = vpow.pop %v1893
        %v1895 = vmul.f32 %v1834, 1.442695
        %v1896 = vpow.pop %v1895
        %v1897 = vmul.f32 %v1835, 1.442695
        %v1898 = vpow.pop %v1897
        %v1899 = vmul.f32 %v1836, 1.442695
        %v1900 = vpow.pop %v1899
        %v1901 = vrot.slane %v1838, 4
        %v1902 = vadd.f32 %v1838, %v1901
        %v1903 = vrot.slane %v1902, 2
        %v1904 = vadd.f32 %v1902, %v1903
        %v1905 = vrot.slane %v1904, 1
        %v1906 = vadd.f32 %v1904, %v1905
        %v1907 = vrot.slane %v1840, 4
        %v1908 = vadd.f32 %v1840, %v1907
        %v1909 = vrot.slane %v1908, 2
        %v1910 = vadd.f32 %v1908, %v1909
        %v1911 = vrot.slane %v1910, 1
        %v1912 = vadd.f32 %v1910, %v1911
        %v1913 = vrot.slane %v1842, 4
        %v1914 = vadd.f32 %v1842, %v1913
        %v1915 = vrot.slane %v1914, 2
        %v1916 = vadd.f32 %v1914, %v1915
        %v1917 = vrot.slane %v1916, 1
        %v1918 = vadd.f32 %v1916, %v1917
        %v1919 = vrot.slane %v1844, 4
        %v1920 = vadd.f32 %v1844, %v1919
        %v1921 = vrot.slane %v1920, 2
        %v1922 = vadd.f32 %v1920, %v1921
        %v1923 = vrot.slane %v1922, 1
        %v1924 = vadd.f32 %v1922, %v1923
        %v1925 = vrot.slane %v1846, 4
        %v1926 = vadd.f32 %v1846, %v1925
        %v1927 = vrot.slane %v1926, 2
        %v1928 = vadd.f32 %v1926, %v1927
        %v1929 = vrot.slane %v1928, 1
        %v1930 = vadd.f32 %v1928, %v1929
        %v1931 = vrot.slane %v1848, 4
        %v1932 = vadd.f32 %v1848, %v1931
        %v1933 = vrot.slane %v1932, 2
        %v1934 = vadd.f32 %v1932, %v1933
        %v1935 = vrot.slane %v1934, 1
        %v1936 = vadd.f32 %v1934, %v1935
        %v1937 = vrot.slane %v1850, 4
        %v1938 = vadd.f32 %v1850, %v1937
        %v1939 = vrot.slane %v1938, 2
        %v1940 = vadd.f32 %v1938, %v1939
        %v1941 = vrot.slane %v1940, 1
        %v1942 = vadd.f32 %v1940, %v1941
        %v1943 = vrot.slane %v1852, 4
        %v1944 = vadd.f32 %v1852, %v1943
        %v1945 = vrot.slane %v1944, 2
        %v1946 = vadd.f32 %v1944, %v1945
        %v1947 = vrot.slane %v1946, 1
        %v1948 = vadd.f32 %v1946, %v1947
        %v1949 = vrot.slane %v1854, 4
        %v1950 = vadd.f32 %v1854, %v1949
        %v1951 = vrot.slane %v1950, 2
        %v1952 = vadd.f32 %v1950, %v1951
        %v1953 = vrot.slane %v1952, 1
        %v1954 = vadd.f32 %v1952, %v1953
        %v1955 = vrot.slane %v1856, 4
        %v1956 = vadd.f32 %v1856, %v1955
        %v1957 = vrot.slane %v1956, 2
        %v1958 = vadd.f32 %v1956, %v1957
        %v1959 = vrot.slane %v1958, 1
        %v1960 = vadd.f32 %v1958, %v1959
        %v1961 = vrot.slane %v1858, 4
        %v1962 = vadd.f32 %v1858, %v1961
        %v1963 = vrot.slane %v1962, 2
        %v1964 = vadd.f32 %v1962, %v1963
        %v1965 = vrot.slane %v1964, 1
        %v1966 = vadd.f32 %v1964, %v1965
        %v1967 = vrot.slane %v1860, 4
        %v1968 = vadd.f32 %v1860, %v1967
        %v1969 = vrot.slane %v1968, 2
        %v1970 = vadd.f32 %v1968, %v1969
        %v1971 = vrot.slane %v1970, 1
        %v1972 = vadd.f32 %v1970, %v1971
        %v1973 = vrot.slane %v1862, 4
        %v1974 = vadd.f32 %v1862, %v1973
        %v1975 = vrot.slane %v1974, 2
        %v1976 = vadd.f32 %v1974, %v1975
        %v1977 = vrot.slane %v1976, 1
        %v1978 = vadd.f32 %v1976, %v1977
        %v1979 = vrot.slane %v1864, 4
        %v1980 = vadd.f32 %v1864, %v1979
        %v1981 = vrot.slane %v1980, 2
        %v1982 = vadd.f32 %v1980, %v1981
        %v1983 = vrot.slane %v1982, 1
        %v1984 = vadd.f32 %v1982, %v1983
        %v1985 = vrot.slane %v1866, 4
        %v1986 = vadd.f32 %v1866, %v1985
        %v1987 = vrot.slane %v1986, 2
        %v1988 = vadd.f32 %v1986, %v1987
        %v1989 = vrot.slane %v1988, 1
        %v1990 = vadd.f32 %v1988, %v1989
        %v1991 = vrot.slane %v1868, 4
        %v1992 = vadd.f32 %v1868, %v1991
        %v1993 = vrot.slane %v1992, 2
        %v1994 = vadd.f32 %v1992, %v1993
        %v1995 = vrot.slane %v1994, 1
        %v1996 = vadd.f32 %v1994, %v1995
        %v1997 = vrot.slane %v1870, 4
        %v1998 = vadd.f32 %v1870, %v1997
        %v1999 = vrot.slane %v1998, 2
        %v2000 = vadd.f32 %v1998, %v1999
        %v2001 = vrot.slane %v2000, 1
        %v2002 = vadd.f32 %v2000, %v2001
        %v2003 = vrot.slane %v1872, 4
        %v2004 = vadd.f32 %v1872, %v2003
        %v2005 = vrot.slane %v2004, 2
        %v2006 = vadd.f32 %v2004, %v2005
        %v2007 = vrot.slane %v2006, 1
        %v2008 = vadd.f32 %v2006, %v2007
        %v2009 = vrot.slane %v1874, 4
        %v2010 = vadd.f32 %v1874, %v2009
        %v2011 = vrot.slane %v2010, 2
        %v2012 = vadd.f32 %v2010, %v2011
        %v2013 = vrot.slane %v2012, 1
        %v2014 = vadd.f32 %v2012, %v2013
        %v2015 = vrot.slane %v1876, 4
        %v2016 = vadd.f32 %v1876, %v2015
        %v2017 = vrot.slane %v2016, 2
        %v2018 = vadd.f32 %v2016, %v2017
        %v2019 = vrot.slane %v2018, 1
        %v2020 = vadd.f32 %v2018, %v2019
        %v2021 = vrot.slane %v1878, 4
        %v2022 = vadd.f32 %v1878, %v2021
        %v2023 = vrot.slane %v2022, 2
        %v2024 = vadd.f32 %v2022, %v2023
        %v2025 = vrot.slane %v2024, 1
        %v2026 = vadd.f32 %v2024, %v2025
        %v2027 = vrot.slane %v1880, 4
        %v2028 = vadd.f32 %v1880, %v2027
        %v2029 = vrot.slane %v2028, 2
        %v2030 = vadd.f32 %v2028, %v2029
        %v2031 = vrot.slane %v2030, 1
        %v2032 = vadd.f32 %v2030, %v2031
        %v2033 = vrot.slane %v1882, 4
        %v2034 = vadd.f32 %v1882, %v2033
        %v2035 = vrot.slane %v2034, 2
        %v2036 = vadd.f32 %v2034, %v2035
        %v2037 = vrot.slane %v2036, 1
        %v2038 = vadd.f32 %v2036, %v2037
        %v2039 = vrot.slane %v1884, 4
        %v2040 = vadd.f32 %v1884, %v2039
        %v2041 = vrot.slane %v2040, 2
        %v2042 = vadd.f32 %v2040, %v2041
        %v2043 = vrot.slane %v2042, 1
        %v2044 = vadd.f32 %v2042, %v2043
        %v2045 = vrot.slane %v1886, 4
        %v2046 = vadd.f32 %v1886, %v2045
        %v2047 = vrot.slane %v2046, 2
        %v2048 = vadd.f32 %v2046, %v2047
        %v2049 = vrot.slane %v2048, 1
        %v2050 = vadd.f32 %v2048, %v2049
        %v2051 = vrot.slane %v1888, 4
        %v2052 = vadd.f32 %v1888, %v2051
        %v2053 = vrot.slane %v2052, 2
        %v2054 = vadd.f32 %v2052, %v2053
        %v2055 = vrot.slane %v2054, 1
        %v2056 = vadd.f32 %v2054, %v2055
        %v2057 = vrot.slane %v1890, 4
        %v2058 = vadd.f32 %v1890, %v2057
        %v2059 = vrot.slane %v2058, 2
        %v2060 = vadd.f32 %v2058, %v2059
        %v2061 = vrot.slane %v2060, 1
        %v2062 = vadd.f32 %v2060, %v2061
        %v2063 = vrot.slane %v1892, 4
        %v2064 = vadd.f32 %v1892, %v2063
        %v2065 = vrot.slane %v2064, 2
        %v2066 = vadd.f32 %v2064, %v2065
        %v2067 = vrot.slane %v2066, 1
        %v2068 = vadd.f32 %v2066, %v2067
        %v2069 = vrot.slane %v1894, 4
        %v2070 = vadd.f32 %v1894, %v2069
        %v2071 = vrot.slane %v2070, 2
        %v2072 = vadd.f32 %v2070, %v2071
        %v2073 = vrot.slane %v2072, 1
        %v2074 = vadd.f32 %v2072, %v2073
        %v2075 = vrot.slane %v1896, 4
        %v2076 = vadd.f32 %v1896, %v2075
        %v2077 = vrot.slane %v2076, 2
        %v2078 = vadd.f32 %v2076, %v2077
        %v2079 = vrot.slane %v2078, 1
        %v2080 = vadd.f32 %v2078, %v2079
        %v2081 = vrot.slane %v1898, 4
        %v2082 = vadd.f32 %v1898, %v2081
        %v2083 = vrot.slane %v2082, 2
        %v2084 = vadd.f32 %v2082, %v2083
        %v2085 = vrot.slane %v2084, 1
        %v2086 = vadd.f32 %v2084, %v2085
        %v2087 = vrot.slane %v1900, 4
        %v2088 = vadd.f32 %v1900, %v2087
        %v2089 = vrot.slane %v2088, 2
        %v2090 = vadd.f32 %v2088, %v2089
        %v2091 = vrot.slane %v2090, 1
        %v2092 = vadd.f32 %v2090, %v2091
        %v2093 = vrcp.pop %v1906
        %v2094 = vrcp.pop %v1912
        %v2095 = vrcp.pop %v1918
        %v2096 = vrcp.pop %v1924
        %v2097 = vrcp.pop %v1930
        %v2098 = vrcp.pop %v1936
        %v2099 = vrcp.pop %v1942
        %v2100 = vrcp.pop %v1948
        %v2101 = vrcp.pop %v1954
        %v2102 = vrcp.pop %v1960
        %v2103 = vrcp.pop %v1966
        %v2104 = vrcp.pop %v1972
        %v2105 = vrcp.pop %v1978
        %v2106 = vrcp.pop %v1984
        %v2107 = vrcp.pop %v1990
        %v2108 = vrcp.pop %v1996
        %v2109 = vrcp.pop %v2002
        %v2110 = vrcp.pop %v2008
        %v2111 = vrcp.pop %v2014
        %v2112 = vrcp.pop %v2020
        %v2113 = vrcp.pop %v2026
        %v2114 = vrcp.pop %v2032
        %v2115 = vrcp.pop %v2038
        %v2116 = vrcp.pop %v2044
        %v2117 = vrcp.pop %v2050
        %v2118 = vrcp.pop %v2056
        %v2119 = vrcp.pop %v2062
        %v2120 = vrcp.pop %v2068
        %v2121 = vrcp.pop %v2074
        %v2122 = vrcp.pop %v2080
        %v2123 = vrcp.pop %v2086
        %v2124 = vrcp.pop %v2092
        %v2125 = vmul.f32 %v1838, %v2093
        %v2126 = vmul.f32 %v1840, %v2094
        %v2127 = vmul.f32 %v1842, %v2095
        %v2128 = vmul.f32 %v1844, %v2096
        %v2129 = vmul.f32 %v1846, %v2097
        %v2130 = vmul.f32 %v1848, %v2098
        %v2131 = vmul.f32 %v1850, %v2099
        %v2132 = vmul.f32 %v1852, %v2100
        %v2133 = vmul.f32 %v1854, %v2101
        %v2134 = vmul.f32 %v1856, %v2102
        %v2135 = vmul.f32 %v1858, %v2103
        %v2136 = vmul.f32 %v1860, %v2104
        %v2137 = vmul.f32 %v1862, %v2105
        %v2138 = vmul.f32 %v1864, %v2106
        %v2139 = vmul.f32 %v1866, %v2107
        %v2140 = vmul.f32 %v1868, %v2108
        %v2141 = vmul.f32 %v1870, %v2109
        %v2142 = vmul.f32 %v1872, %v2110
        %v2143 = vmul.f32 %v1874, %v2111
        %v2144 = vmul.f32 %v1876, %v2112
        %v2145 = vmul.f32 %v1878, %v2113
        %v2146 = vmul.f32 %v1880, %v2114
        %v2147 = vmul.f32 %v1882, %v2115
        %v2148 = vmul.f32 %v1884, %v2116
        %v2149 = vmul.f32 %v1886, %v2117
        %v2150 = vmul.f32 %v1888, %v2118
        %v2151 = vmul.f32 %v1890, %v2119
        %v2152 = vmul.f32 %v1892, %v2120
        %v2153 = vmul.f32 %v1894, %v2121
        %v2154 = vmul.f32 %v1896, %v2122
        %v2155 = vmul.f32 %v1898, %v2123
        %v2156 = vmul.f32 %v1900, %v2124
        %v2157 = vrot.slane %v2125, 4
        %v2158 = vadd.f32 %v2125, %v2157
        %v2159 = vrot.slane %v2158, 2
        %v2160 = vadd.f32 %v2158, %v2159
        %v2161 = vrot.slane %v2160, 1
        %v2162 = vadd.f32 %v2160, %v2161
        %v2163 = vrot.slane %v2126, 4
        %v2164 = vadd.f32 %v2126, %v2163
        %v2165 = vrot.slane %v2164, 2
        %v2166 = vadd.f32 %v2164, %v2165
        %v2167 = vrot.slane %v2166, 1
        %v2168 = vadd.f32 %v2166, %v2167
        %v2169 = vrot.slane %v2127, 4
        %v2170 = vadd.f32 %v2127, %v2169
        %v2171 = vrot.slane %v2170, 2
        %v2172 = vadd.f32 %v2170, %v2171
        %v2173 = vrot.slane %v2172, 1
        %v2174 = vadd.f32 %v2172, %v2173
        %v2175 = vrot.slane %v2128, 4
        %v2176 = vadd.f32 %v2128, %v2175
        %v2177 = vrot.slane %v2176, 2
        %v2178 = vadd.f32 %v2176, %v2177
        %v2179 = vrot.slane %v2178, 1
        %v2180 = vadd.f32 %v2178, %v2179
        %v2181 = vrot.slane %v2129, 4
        %v2182 = vadd.f32 %v2129, %v2181
        %v2183 = vrot.slane %v2182, 2
        %v2184 = vadd.f32 %v2182, %v2183
        %v2185 = vrot.slane %v2184, 1
        %v2186 = vadd.f32 %v2184, %v2185
        %v2187 = vrot.slane %v2130, 4
        %v2188 = vadd.f32 %v2130, %v2187
        %v2189 = vrot.slane %v2188, 2
        %v2190 = vadd.f32 %v2188, %v2189
        %v2191 = vrot.slane %v2190, 1
        %v2192 = vadd.f32 %v2190, %v2191
        %v2193 = vrot.slane %v2131, 4
        %v2194 = vadd.f32 %v2131, %v2193
        %v2195 = vrot.slane %v2194, 2
        %v2196 = vadd.f32 %v2194, %v2195
        %v2197 = vrot.slane %v2196, 1
        %v2198 = vadd.f32 %v2196, %v2197
        %v2199 = vrot.slane %v2132, 4
        %v2200 = vadd.f32 %v2132, %v2199
        %v2201 = vrot.slane %v2200, 2
        %v2202 = vadd.f32 %v2200, %v2201
        %v2203 = vrot.slane %v2202, 1
        %v2204 = vadd.f32 %v2202, %v2203
        %v2205 = vrot.slane %v2133, 4
        %v2206 = vadd.f32 %v2133, %v2205
        %v2207 = vrot.slane %v2206, 2
        %v2208 = vadd.f32 %v2206, %v2207
        %v2209 = vrot.slane %v2208, 1
        %v2210 = vadd.f32 %v2208, %v2209
        %v2211 = vrot.slane %v2134, 4
        %v2212 = vadd.f32 %v2134, %v2211
        %v2213 = vrot.slane %v2212, 2
        %v2214 = vadd.f32 %v2212, %v2213
        %v2215 = vrot.slane %v2214, 1
        %v2216 = vadd.f32 %v2214, %v2215
        %v2217 = vrot.slane %v2135, 4
        %v2218 = vadd.f32 %v2135, %v2217
        %v2219 = vrot.slane %v2218, 2
        %v2220 = vadd.f32 %v2218, %v2219
        %v2221 = vrot.slane %v2220, 1
        %v2222 = vadd.f32 %v2220, %v2221
        %v2223 = vrot.slane %v2136, 4
        %v2224 = vadd.f32 %v2136, %v2223
        %v2225 = vrot.slane %v2224, 2
        %v2226 = vadd.f32 %v2224, %v2225
        %v2227 = vrot.slane %v2226, 1
        %v2228 = vadd.f32 %v2226, %v2227
        %v2229 = vrot.slane %v2137, 4
        %v2230 = vadd.f32 %v2137, %v2229
        %v2231 = vrot.slane %v2230, 2
        %v2232 = vadd.f32 %v2230, %v2231
        %v2233 = vrot.slane %v2232, 1
        %v2234 = vadd.f32 %v2232, %v2233
        %v2235 = vrot.slane %v2138, 4
        %v2236 = vadd.f32 %v2138, %v2235
        %v2237 = vrot.slane %v2236, 2
        %v2238 = vadd.f32 %v2236, %v2237
        %v2239 = vrot.slane %v2238, 1
        %v2240 = vadd.f32 %v2238, %v2239
        %v2241 = vrot.slane %v2139, 4
        %v2242 = vadd.f32 %v2139, %v2241
        %v2243 = vrot.slane %v2242, 2
        %v2244 = vadd.f32 %v2242, %v2243
        %v2245 = vrot.slane %v2244, 1
        %v2246 = vadd.f32 %v2244, %v2245
        %v2247 = vrot.slane %v2140, 4
        %v2248 = vadd.f32 %v2140, %v2247
        %v2249 = vrot.slane %v2248, 2
        %v2250 = vadd.f32 %v2248, %v2249
        %v2251 = vrot.slane %v2250, 1
        %v2252 = vadd.f32 %v2250, %v2251
        %v2253 = vrot.slane %v2141, 4
        %v2254 = vadd.f32 %v2141, %v2253
        %v2255 = vrot.slane %v2254, 2
        %v2256 = vadd.f32 %v2254, %v2255
        %v2257 = vrot.slane %v2256, 1
        %v2258 = vadd.f32 %v2256, %v2257
        %v2259 = vrot.slane %v2142, 4
        %v2260 = vadd.f32 %v2142, %v2259
        %v2261 = vrot.slane %v2260, 2
        %v2262 = vadd.f32 %v2260, %v2261
        %v2263 = vrot.slane %v2262, 1
        %v2264 = vadd.f32 %v2262, %v2263
        %v2265 = vrot.slane %v2143, 4
        %v2266 = vadd.f32 %v2143, %v2265
        %v2267 = vrot.slane %v2266, 2
        %v2268 = vadd.f32 %v2266, %v2267
        %v2269 = vrot.slane %v2268, 1
        %v2270 = vadd.f32 %v2268, %v2269
        %v2271 = vrot.slane %v2144, 4
        %v2272 = vadd.f32 %v2144, %v2271
        %v2273 = vrot.slane %v2272, 2
        %v2274 = vadd.f32 %v2272, %v2273
        %v2275 = vrot.slane %v2274, 1
        %v2276 = vadd.f32 %v2274, %v2275
        %v2277 = vrot.slane %v2145, 4
        %v2278 = vadd.f32 %v2145, %v2277
        %v2279 = vrot.slane %v2278, 2
        %v2280 = vadd.f32 %v2278, %v2279
        %v2281 = vrot.slane %v2280, 1
        %v2282 = vadd.f32 %v2280, %v2281
        %v2283 = vrot.slane %v2146, 4
        %v2284 = vadd.f32 %v2146, %v2283
        %v2285 = vrot.slane %v2284, 2
        %v2286 = vadd.f32 %v2284, %v2285
        %v2287 = vrot.slane %v2286, 1
        %v2288 = vadd.f32 %v2286, %v2287
        %v2289 = vrot.slane %v2147, 4
        %v2290 = vadd.f32 %v2147, %v2289
        %v2291 = vrot.slane %v2290, 2
        %v2292 = vadd.f32 %v2290, %v2291
        %v2293 = vrot.slane %v2292, 1
        %v2294 = vadd.f32 %v2292, %v2293
        %v2295 = vrot.slane %v2148, 4
        %v2296 = vadd.f32 %v2148, %v2295
        %v2297 = vrot.slane %v2296, 2
        %v2298 = vadd.f32 %v2296, %v2297
        %v2299 = vrot.slane %v2298, 1
        %v2300 = vadd.f32 %v2298, %v2299
        %v2301 = vrot.slane %v2149, 4
        %v2302 = vadd.f32 %v2149, %v2301
        %v2303 = vrot.slane %v2302, 2
        %v2304 = vadd.f32 %v2302, %v2303
        %v2305 = vrot.slane %v2304, 1
        %v2306 = vadd.f32 %v2304, %v2305
        %v2307 = vrot.slane %v2150, 4
        %v2308 = vadd.f32 %v2150, %v2307
        %v2309 = vrot.slane %v2308, 2
        %v2310 = vadd.f32 %v2308, %v2309
        %v2311 = vrot.slane %v2310, 1
        %v2312 = vadd.f32 %v2310, %v2311
        %v2313 = vrot.slane %v2151, 4
        %v2314 = vadd.f32 %v2151, %v2313
        %v2315 = vrot.slane %v2314, 2
        %v2316 = vadd.f32 %v2314, %v2315
        %v2317 = vrot.slane %v2316, 1
        %v2318 = vadd.f32 %v2316, %v2317
        %v2319 = vrot.slane %v2152, 4
        %v2320 = vadd.f32 %v2152, %v2319
        %v2321 = vrot.slane %v2320, 2
        %v2322 = vadd.f32 %v2320, %v2321
        %v2323 = vrot.slane %v2322, 1
        %v2324 = vadd.f32 %v2322, %v2323
        %v2325 = vrot.slane %v2153, 4
        %v2326 = vadd.f32 %v2153, %v2325
        %v2327 = vrot.slane %v2326, 2
        %v2328 = vadd.f32 %v2326, %v2327
        %v2329 = vrot.slane %v2328, 1
        %v2330 = vadd.f32 %v2328, %v2329
        %v2331 = vrot.slane %v2154, 4
        %v2332 = vadd.f32 %v2154, %v2331
        %v2333 = vrot.slane %v2332, 2
        %v2334 = vadd.f32 %v2332, %v2333
        %v2335 = vrot.slane %v2334, 1
        %v2336 = vadd.f32 %v2334, %v2335
        %v2337 = vrot.slane %v2155, 4
        %v2338 = vadd.f32 %v2155, %v2337
        %v2339 = vrot.slane %v2338, 2
        %v2340 = vadd.f32 %v2338, %v2339
        %v2341 = vrot.slane %v2340, 1
        %v2342 = vadd.f32 %v2340, %v2341
        %v2343 = vrot.slane %v2156, 4
        %v2344 = vadd.f32 %v2156, %v2343
        %v2345 = vrot.slane %v2344, 2
        %v2346 = vadd.f32 %v2344, %v2345
        %v2347 = vrot.slane %v2346, 1
        %v2348 = vadd.f32 %v2346, %v2347
        %v2349 = vrcp.pop %v2162
        %v2350 = vrcp.pop %v2168
        %v2351 = vrcp.pop %v2174
        %v2352 = vrcp.pop %v2180
        %v2353 = vrcp.pop %v2186
        %v2354 = vrcp.pop %v2192
        %v2355 = vrcp.pop %v2198
        %v2356 = vrcp.pop %v2204
        %v2357 = vrcp.pop %v2210
        %v2358 = vrcp.pop %v2216
        %v2359 = vrcp.pop %v2222
        %v2360 = vrcp.pop %v2228
        %v2361 = vrcp.pop %v2234
        %v2362 = vrcp.pop %v2240
        %v2363 = vrcp.pop %v2246
        %v2364 = vrcp.pop %v2252
        %v2365 = vrcp.pop %v2258
        %v2366 = vrcp.pop %v2264
        %v2367 = vrcp.pop %v2270
        %v2368 = vrcp.pop %v2276
        %v2369 = vrcp.pop %v2282
        %v2370 = vrcp.pop %v2288
        %v2371 = vrcp.pop %v2294
        %v2372 = vrcp.pop %v2300
        %v2373 = vrcp.pop %v2306
        %v2374 = vrcp.pop %v2312
        %v2375 = vrcp.pop %v2318
        %v2376 = vrcp.pop %v2324
        %v2377 = vrcp.pop %v2330
        %v2378 = vrcp.pop %v2336
        %v2379 = vrcp.pop %v2342
        %v2380 = vrcp.pop %v2348
        %v2381 = vmul.f32 %v2125, %v2349
        %v2382 = vmul.f32 %v2126, %v2350
        %v2383 = vmul.f32 %v2127, %v2351
        %v2384 = vmul.f32 %v2128, %v2352
        %v2385 = vmul.f32 %v2129, %v2353
        %v2386 = vmul.f32 %v2130, %v2354
        %v2387 = vmul.f32 %v2131, %v2355
        %v2388 = vmul.f32 %v2132, %v2356
        %v2389 = vmul.f32 %v2133, %v2357
        %v2390 = vmul.f32 %v2134, %v2358
        %v2391 = vmul.f32 %v2135, %v2359
        %v2392 = vmul.f32 %v2136, %v2360
        %v2393 = vmul.f32 %v2137, %v2361
        %v2394 = vmul.f32 %v2138, %v2362
        %v2395 = vmul.f32 %v2139, %v2363
        %v2396 = vmul.f32 %v2140, %v2364
        %v2397 = vmul.f32 %v2141, %v2365
        %v2398 = vmul.f32 %v2142, %v2366
        %v2399 = vmul.f32 %v2143, %v2367
        %v2400 = vmul.f32 %v2144, %v2368
        %v2401 = vmul.f32 %v2145, %v2369
        %v2402 = vmul.f32 %v2146, %v2370
        %v2403 = vmul.f32 %v2147, %v2371
        %v2404 = vmul.f32 %v2148, %v2372
        %v2405 = vmul.f32 %v2149, %v2373
        %v2406 = vmul.f32 %v2150, %v2374
        %v2407 = vmul.f32 %v2151, %v2375
        %v2408 = vmul.f32 %v2152, %v2376
        %v2409 = vmul.f32 %v2153, %v2377
        %v2410 = vmul.f32 %v2154, %v2378
        %v2411 = vmul.f32 %v2155, %v2379
        %v2412 = vmul.f32 %v2156, %v2380
        %2413 = vst [vmem:[%s164] sm:$0xff] %v2381
        %2414 = vst [vmem:[%s164 + $0x8] sm:$0xff] %v2382
        %2415 = vst [vmem:[%s164 + $0x10] sm:$0xff] %v2383
        %2416 = vst [vmem:[%s164 + $0x18] sm:$0xff] %v2384
        %2417 = vst [vmem:[%s164 + $0x20] sm:$0xff] %v2385
        %2418 = vst [vmem:[%s164 + $0x28] sm:$0xff] %v2386
        %2419 = vst [vmem:[%s164 + $0x30] sm:$0xff] %v2387
        %2420 = vst [vmem:[%s164 + $0x38] sm:$0xff] %v2388
        %2421 = vst [vmem:[%s164 + $0x40] sm:$0xff] %v2389
        %2422 = vst [vmem:[%s164 + $0x48] sm:$0xff] %v2390
        %2423 = vst [vmem:[%s164 + $0x50] sm:$0xff] %v2391
        %2424 = vst [vmem:[%s164 + $0x58] sm:$0xff] %v2392
        %2425 = vst [vmem:[%s164 + $0x60] sm:$0xff] %v2393
        %2426 = vst [vmem:[%s164 + $0x68] sm:$0xff] %v2394
        %2427 = vst [vmem:[%s164 + $0x70] sm:$0xff] %v2395
        %2428 = vst [vmem:[%s164 + $0x78] sm:$0xff] %v2396
        %2429 = vst [vmem:[%s164 + $0x80] sm:$0xff] %v2397
        %2430 = vst [vmem:[%s164 + $0x88] sm:$0xff] %v2398
        %2431 = vst [vmem:[%s164 + $0x90] sm:$0xff] %v2399
        %2432 = vst [vmem:[%s164 + $0x98] sm:$0xff] %v2400
        %2433 = vst [vmem:[%s164 + $0xa0] sm:$0xff] %v2401
        %2434 = vst [vmem:[%s164 + $0xa8] sm:$0xff] %v2402
        %2435 = vst [vmem:[%s164 + $0xb0] sm:$0xff] %v2403
        %2436 = vst [vmem:[%s164 + $0xb8] sm:$0xff] %v2404
        %2437 = vst [vmem:[%s164 + $0xc0] sm:$0xff] %v2405
        %2438 = vst [vmem:[%s164 + $0xc8] sm:$0xff] %v2406
        %2439 = vst [vmem:[%s164 + $0xd0] sm:$0xff] %v2407
        %2440 = vst [vmem:[%s164 + $0xd8] sm:$0xff] %v2408
        %2441 = vst [vmem:[%s164 + $0xe0] sm:$0xff] %v2409
        %2442 = vst [vmem:[%s164 + $0xe8] sm:$0xff] %v2410
        %2443 = vst [vmem:[%s164 + $0xf0] sm:$0xff] %v2411
        %2444 = vst [vmem:[%s164 + $0xf8] sm:$0xff] %v2412
        %s2445 = sand.u32 %s93, 1
        %s2446 = scalar_lea.sflag [#allocation3], %s2445
        %s2447 = sand.u32 %s93, 1
        %s2448 = smul.addr %s2447, 256
        %s2449 = scalar_lea.vmem [#allocation2], %s2448
        // Predicated region
        $region33: #{tpu_custom_call.1} parent=31 // pred_check
          %p2450 = pneg %p103
        $region34: #{tpu_custom_call.1} parent=31 // pred_check_branch
          %2452 = sbr.rel (%p2450) target = $region36
        $region35: #{tpu_custom_call.1} parent=31 // pred_region
          %s2453 = smul.u32 32, %s17
          %s2455 = ssub.s32 4096, 4096
          %2456 = vsyncadd %s2446, %s2455
          %s2457 = smul.addr %s2453, 128
          %s2458 = scalar_lea.hbm %s3, %s2457
          %s2459 = sshll.u32 %s2449, 4
          %s2460 = int_to_ptr.vmem [resolvable:$true] %s2459
          %2465 = dma.vmem_to_hbm [thread:$0]  %s2460, 4096, %s2458, %s2446, 128, 128, 8
        $region36: #{tpu_custom_call.1} parent=31 // pred_fallthru
          _
      $region32: #{tpu_custom_call.1} parent=5 // pred_fallthru
        _
      %p2466 = scmp.le.s32.totalorder 2, %s12
      // Predicated region
      $region37: #{tpu_custom_call.1} parent=5 // pred_check
        %p2467 = pneg %p2466
      $region38: #{tpu_custom_call.1} parent=5 // pred_check_branch
        %2469 = sbr.rel (%p2467) target = $region40
      $region39: #{tpu_custom_call.1} parent=5 // pred_region
        %s2470 = ssub.s32 %s12, 2
        // Predicated region
        $region41: #{tpu_custom_call.1} parent=39 // pred_check
          %p2471 = pneg %p109
        $region42: #{tpu_custom_call.1} parent=39 // pred_check_branch
          %2473 = sbr.rel (%p2471) target = $region44
        $region43: #{tpu_custom_call.1} parent=39 // pred_region
          %s2474 = sand.u32 %s94, 1
          %s2475 = scalar_lea.sflag [#allocation3], %s2474
          %s2476 = sand.u32 %s94, 1
          %s2477 = smul.addr %s2476, 256
          %s2478 = scalar_lea.vmem [#allocation2], %s2477
          %2479 = dma.done %s2475, 4096
        $region44: #{tpu_custom_call.1} parent=39 // pred_fallthru
          _
      $region40: #{tpu_custom_call.1} parent=5 // pred_fallthru
        _
    $region6: #{tpu_custom_call.1} parent=1 // loop_footer
      %s16 = sadd.s32 1, %s12
    $region7: #{tpu_custom_call.1} parent=1 // loop_footer_branch
      %11 = sbr.rel target = $region3
    $region8: #{tpu_custom_call.1} parent=1 // loop_exit
      _
    %2480 = vsyncpa [#allocation3], 1
    %s2481 = scalar_lea.sflag [#allocation3], 1
    %2482 = vsyncpa %s2481, 1

</llo_original>
